<compile_context>
chip_gen: v5e
topology: v5e:2x2
jax: 0.10.0
libtpu: 0.0.40
codegen_flags: <defaults>
</compile_context>

<pallas_src>
import functools

import jax
import jax.numpy as jnp
from jax import lax
from jax.experimental import pallas as pl
from jax.experimental.pallas import tpu as pltpu

_LANE = 128
_SUBLANE = 8


def _lstm_encoder_kernel(x_ref, wih_ref, whh_ref, b_ref, wl_ref, bl_ref,
                         out_ref, xw_ref, *, seq_len, hidden_padded, unroll):
    """LSTM recurrence + final Linear for one batch block.

    x_ref  : (S, TB, D)    time-major input block, bf16
    wih_ref: (D, 4Hp)      input->gates weights (transposed, gate-padded), bf16
    whh_ref: (Hp, 4Hp)     hidden->gates weights (transposed, gate-padded), bf16
    b_ref  : (1, 4Hp)      bias_ih + bias_hh (gate-padded), f32
    wl_ref : (Hp, Lp)      transposed Linear weight (padded), bf16
    bl_ref : (1, Lp)       Linear bias (padded), f32
    out_ref: (TB, Lp)      latent output (padded lanes), f32
    xw_ref : (S, TB, 4Hp)  VMEM scratch for the hoisted x @ W_ih^T, bf16
    """
    S = seq_len
    Hp = hidden_padded
    TB = x_ref.shape[1]

    # --- Hoisted input projection (off the serial critical path), stored
    # time-major so the recurrence only does contiguous leading-axis reads.
    wih = wih_ref[...]                                           # (D, 4Hp) bf16

    def proj_step(t, carry):
        xw_ref[t] = jnp.dot(x_ref[t], wih,
                            preferred_element_type=jnp.float32
                            ).astype(xw_ref.dtype)               # (TB, 4Hp)
        return carry

    lax.fori_loop(0, S, proj_step, 0, unroll=unroll)

    # f32 bias; broadcast hoisted out of the loop (JAX does not CSE it).
    bb = jnp.broadcast_to(b_ref[...], (TB, 4 * Hp))              # (TB, 4Hp) f32

    def cell(t, carry):
        h, c = carry
        # Only one (TB, Hp) @ (Hp, 4Hp) MXU dot remains on the serial path.
        gates = (xw_ref[t].astype(jnp.float32) + bb
                 + jnp.dot(h.astype(jnp.bfloat16), whh_ref[...],
                           preferred_element_type=jnp.float32))  # (TB, 4Hp) f32
        # Lane-dense 128-wide gate slices (Hp is a multiple of 128).
        i_g = jax.nn.sigmoid(gates[:, 0 * Hp:1 * Hp])
        f_g = jax.nn.sigmoid(gates[:, 1 * Hp:2 * Hp])
        g_g = jnp.tanh(gates[:, 2 * Hp:3 * Hp])
        o_g = jax.nn.sigmoid(gates[:, 3 * Hp:4 * Hp])
        c_new = f_g * c + i_g * g_g
        h_new = o_g * jnp.tanh(c_new)
        return h_new, c_new

    h0 = jnp.zeros((TB, Hp), jnp.float32)
    c0 = jnp.zeros((TB, Hp), jnp.float32)
    # fori_loop with unroll bounds live ranges while keeping LLO visibility
    # (a static Python `for` does not bound them).
    h, _ = lax.fori_loop(0, S, cell, (h0, c0), unroll=unroll)

    # Final Linear; Lp is a multiple of 128 -> unmasked lane-dense store.
    out_ref[...] = (jnp.dot(h.astype(wl_ref.dtype), wl_ref[...],
                            preferred_element_type=jnp.float32)
                    + bl_ref[...])


def _round_up(n, m):
    return ((n + m - 1) // m) * m


def _vmem_capacity_bytes():
    try:
        return int(pltpu.get_tpu_info().vmem_capacity_bytes)
    except Exception:
        return 64 << 20          # conservative fallback: v7x per-TensorCore VMEM


def _tensorcores_per_device():
    # v4/v5p (megacore) and v7x expose 2 TensorCores a "parallel" grid axis can
    # shard across; v5e/v6e have one.  Misdetection only affects perf, not math.
    try:
        kind = jax.devices()[0].device_kind.lower()
    except Exception:
        return 1
    return 2 if any(tag in kind for tag in ("v4", "v5p", "7x")) else 1


def _choose_batch_block(B, S, D, Hp, Lp, budget_bytes, num_cores):
    """VMEM-budgeted batch block TB (rows) and padded batch Bp."""
    def vmem_need(tb):
        xw = S * tb * 4 * Hp * 2                        # bf16 scratch (1 copy)
        xin = 2 * S * tb * D * 2                        # x block, double-buffered
        out = 2 * tb * Lp * 4                           # out block, double-buffered
        wts = 2 * (D * 4 * Hp * 2 + Hp * 4 * Hp * 2 + 4 * Hp * 4
                   + Hp * Lp * 2 + Lp * 4)              # weights, double-buffered
        live = 3 * tb * 4 * Hp * 4 + 8 * tb * Hp * 4    # gates + activations + h/c
        return xw + xin + out + wts + live

    cap = 256                                            # enough rows to fill MXU M
    while cap > _SUBLANE and vmem_need(cap) > budget_bytes:
        cap //= 2

    if num_cores > 1 and B >= 2 * _SUBLANE:
        # Expose >= 2 sublane-aligned batch blocks so both TensorCores work.
        tb = min(cap, _round_up(pl.cdiv(B, num_cores), _SUBLANE))
    elif B <= cap:
        tb = B                                           # one full-batch block
    else:
        tb = cap                                         # VMEM-limited tiling
    bp = _round_up(B, tb)
    return tb, bp


def lstm_encoder(x, w_ih, w_hh, b_ih, b_hh, w_lat, b_lat):
    """x: (batch, seq, input) float32.  Returns latent: (batch, latent) float32."""
    B, S, D = x.shape
    H = w_ih.shape[0] // 4
    L = w_lat.shape[0]

    Hp = _round_up(H, _LANE)
    Lp = _round_up(L, _LANE)

    f32 = jnp.float32
    bf16 = jnp.bfloat16

    # --- Gate-block padded, transposed weights (gate order [i, f, g, o] kept).
    # Padded lanes get zero weights and zero bias, so the padded part of the
    # hidden/cell state stays exactly zero through the whole recurrence.
    w_ih4 = w_ih.astype(f32).reshape(4, H, D)
    wih_p = jnp.transpose(jnp.pad(w_ih4, ((0, 0), (0, Hp - H), (0, 0))),
                          (2, 0, 1)).reshape(D, 4 * Hp).astype(bf16)          # (D, 4Hp)
    w_hh4 = w_hh.astype(f32).reshape(4, H, H)
    whh_p = jnp.transpose(jnp.pad(w_hh4, ((0, 0), (0, Hp - H), (0, Hp - H))),
                          (2, 0, 1)).reshape(Hp, 4 * Hp).astype(bf16)         # (Hp, 4Hp)
    b4 = (b_ih + b_hh).astype(f32).reshape(4, H)
    b_p = jnp.pad(b4, ((0, 0), (0, Hp - H))).reshape(1, 4 * Hp)               # (1, 4Hp)
    wl_p = jnp.transpose(jnp.pad(w_lat.astype(f32),
                                 ((0, Lp - L), (0, Hp - H)))).astype(bf16)    # (Hp, Lp)
    bl_p = jnp.pad(b_lat.astype(f32), (0, Lp - L)).reshape(1, Lp)             # (1, Lp)

    # --- VMEM-budgeted batch block; pad B up to a multiple of TB.
    vmem_cap = _vmem_capacity_bytes()
    num_cores = _tensorcores_per_device()
    TB, Bp = _choose_batch_block(B, S, D, Hp, Lp,
                                 budget_bytes=vmem_cap // 2,
                                 num_cores=num_cores)
    grid = (Bp // TB,)

    # Time-major input: the one-time wrapper transpose is far cheaper than
    # per-step strided slices inside the serial recurrence.
    x_tm = jnp.transpose(x.astype(bf16), (1, 0, 2))                            # (S, B, D)
    if Bp != B:
        x_tm = jnp.pad(x_tm, ((0, 0), (0, Bp - B), (0, 0)))

    unroll = True if S <= 32 else 4

    kernel = functools.partial(_lstm_encoder_kernel, seq_len=S,
                               hidden_padded=Hp, unroll=unroll)

    # TODO(synk): for very long S, tile the sequence with an "arbitrary" grid
    # axis carrying h/c in VMEM scratch (S-independent xw footprint), and
    # single-buffer the grid-invariant weight operands via
    # pipeline_mode=pl.Buffered(1) once verified on the target jaxlib.
    out_p = pl.pallas_call(
        kernel,
        out_shape=jax.ShapeDtypeStruct((Bp, Lp), jnp.float32),
        grid=grid,
        in_specs=[
            pl.BlockSpec((S, TB, D), lambda b: (0, b, 0)),     # x (time-major)
            pl.BlockSpec((D, 4 * Hp), lambda b: (0, 0)),       # W_ih^T
            pl.BlockSpec((Hp, 4 * Hp), lambda b: (0, 0)),      # W_hh^T
            pl.BlockSpec((1, 4 * Hp), lambda b: (0, 0)),       # bias
            pl.BlockSpec((Hp, Lp), lambda b: (0, 0)),          # W_lat^T
            pl.BlockSpec((1, Lp), lambda b: (0, 0)),           # b_lat
        ],
        out_specs=pl.BlockSpec((TB, Lp), lambda b: (b, 0)),
        scratch_shapes=[pltpu.VMEM((S, TB, 4 * Hp), bf16)],    # hoisted x @ W_ih^T
        compiler_params=pltpu.CompilerParams(
            dimension_semantics=("parallel",),
            vmem_limit_bytes=int(vmem_cap * 0.85)),
    )(x_tm, wih_p, whh_p, b_p, wl_p, bl_p)

    return out_p[:B, :L]


def _reference(x, w_ih, w_hh, b_ih, b_hh, w_lat, b_lat):
    """Pure-JAX f32 reference mimicking torch.nn.LSTM (batch_first) + Linear."""
    B, S, D = x.shape
    H = w_hh.shape[1]
    h = jnp.zeros((B, H), jnp.float32)
    c = jnp.zeros((B, H), jnp.float32)
    for t in range(S):
        g = x[:, t, :] @ w_ih.T + h @ w_hh.T + b_ih + b_hh
        i = jax.nn.sigmoid(g[:, 0 * H:1 * H])
        f = jax.nn.sigmoid(g[:, 1 * H:2 * H])
        gg = jnp.tanh(g[:, 2 * H:3 * H])
        o = jax.nn.sigmoid(g[:, 3 * H:4 * H])
        c = f * c + i * gg
        h = o * jnp.tanh(c)
    return h @ w_lat.T + b_lat


if __name__ == "__main__":
    # Small shapes consistent with the module's forward pass.
    batch, seq, input_size, hidden_size, latent_size = 2, 8, 16, 32, 8

    key = jax.random.PRNGKey(0)
    ks = jax.random.split(key, 8)
    bound = 1.0 / (hidden_size ** 0.5)   # PyTorch default uniform init bound

    x = jax.random.normal(ks[0], (batch, seq, input_size), dtype=jnp.float32)
    w_ih = jax.random.uniform(ks[1], (4 * hidden_size, input_size),
                              minval=-bound, maxval=bound, dtype=jnp.float32)
    w_hh = jax.random.uniform(ks[2], (4 * hidden_size, hidden_size),
                              minval=-bound, maxval=bound, dtype=jnp.float32)
    b_ih = jax.random.uniform(ks[3], (4 * hidden_size,),
                              minval=-bound, maxval=bound, dtype=jnp.float32)
    b_hh = jax.random.uniform(ks[4], (4 * hidden_size,),
                              minval=-bound, maxval=bound, dtype=jnp.float32)
    w_lat = jax.random.uniform(ks[5], (latent_size, hidden_size),
                               minval=-bound, maxval=bound, dtype=jnp.float32)
    b_lat = jax.random.uniform(ks[6], (latent_size,),
                               minval=-bound, maxval=bound, dtype=jnp.float32)

    latent = lstm_encoder(x, w_ih, w_hh, b_ih, b_hh, w_lat, b_lat)
    latent = jax.block_until_ready(latent)

    ref = _reference(x, w_ih, w_hh, b_ih, b_hh, w_lat, b_lat)
    assert latent.shape == (batch, latent_size)
    err = float(jnp.max(jnp.abs(latent - ref)))
    # bf16 matmul operands / bf16 xw scratch with f32 accumulation & state:
    # allow small numeric drift vs the f32 reference.
    assert err < 3e-2, f"mismatch vs pure-JAX reference: {err}"

    print("KERNEL_OK")
</pallas_src>

<mosaic_0001>
module attributes {stable_mosaic.version = 11 : i64} {
  func.func @_lstm_encoder_kernel(%arg0: i32, %arg1: memref<8x2x16xbf16, #tpu.memory_space<vmem>>, %arg2: memref<16x512xbf16, #tpu.memory_space<vmem>>, %arg3: memref<128x512xbf16, #tpu.memory_space<vmem>>, %arg4: memref<1x512xf32, #tpu.memory_space<vmem>>, %arg5: memref<128x128xbf16, #tpu.memory_space<vmem>>, %arg6: memref<1x128xf32, #tpu.memory_space<vmem>>, %arg7: memref<2x128xf32, #tpu.memory_space<vmem>>, %arg8: memref<8x2x512xbf16, #tpu.memory_space<vmem>>) attributes {dimension_semantics = [#tpu.dimension_semantics<parallel>], iteration_bounds = array<i64: 1>, scalar_prefetch = 0 : i64, scratch_operands = 1 : i64, tpu.core_type = #tpu.core_type<tc>, window_params = [{transform_indices = @transform_0, window_bounds = array<i64: 8, 2, 16>}, {pipeline_mode = #tpu.pipeline_mode<synchronous>, transform_indices = @transform_1, window_bounds = array<i64: 16, 512>}, {pipeline_mode = #tpu.pipeline_mode<synchronous>, transform_indices = @transform_2, window_bounds = array<i64: 128, 512>}, {pipeline_mode = #tpu.pipeline_mode<synchronous>, transform_indices = @transform_3, window_bounds = array<i64: 1, 512>}, {pipeline_mode = #tpu.pipeline_mode<synchronous>, transform_indices = @transform_4, window_bounds = array<i64: 128, 128>}, {pipeline_mode = #tpu.pipeline_mode<synchronous>, transform_indices = @transform_5, window_bounds = array<i64: 1, 128>}, {transform_indices = @transform_6, window_bounds = array<i64: 2, 128>}]} {
    %c0 = arith.constant 0 : index
    %c0_0 = arith.constant 0 : index
    %0 = vector.load %arg2[%c0, %c0_0] : memref<16x512xbf16, #tpu.memory_space<vmem>>, vector<16x512xbf16>
    %c0_i32 = arith.constant 0 : i32
    %1 = arith.index_cast %c0_i32 : i32 to index
    %c0_1 = arith.constant 0 : index
    %c0_2 = arith.constant 0 : index
    %2 = vector.load %arg1[%1, %c0_1, %c0_2] : memref<8x2x16xbf16, #tpu.memory_space<vmem>>, vector<1x2x16xbf16>
    %3 = vector.shape_cast %2 : vector<1x2x16xbf16> to vector<2x16xbf16>
    %cst = arith.constant dense<0.000000e+00> : vector<2x512xf32>
    %4 = tpu.matmul %3, %0, %cst {dimension_numbers = #tpu.dot_dimension_numbers<[1], [0], [0], [1], [0, 0, 1, 1], [], []>} : vector<2x16xbf16>, vector<16x512xbf16>, vector<2x512xf32> -> vector<2x512xf32>
    %5 = arith.truncf %4 : vector<2x512xf32> to vector<2x512xbf16>
    %6 = arith.index_cast %c0_i32 : i32 to index
    %c0_3 = arith.constant 0 : index
    %c0_4 = arith.constant 0 : index
    %7 = vector.load %arg8[%6, %c0_3, %c0_4] : memref<8x2x512xbf16, #tpu.memory_space<vmem>>, vector<1x2x512xbf16>
    %8 = vector.shape_cast %7 : vector<1x2x512xbf16> to vector<2x512xbf16>
    %9 = vector.shape_cast %5 : vector<2x512xbf16> to vector<1x2x512xbf16>
    tpu.vector_store %arg8[%6, %c0_3, %c0_4], %9 {strides = array<i32>} : memref<8x2x512xbf16, #tpu.memory_space<vmem>>, vector<1x2x512xbf16>,
    %c1_i32 = arith.constant 1 : i32
    %10 = arith.index_cast %c1_i32 : i32 to index
    %c0_5 = arith.constant 0 : index
    %c0_6 = arith.constant 0 : index
    %11 = vector.load %arg1[%10, %c0_5, %c0_6] : memref<8x2x16xbf16, #tpu.memory_space<vmem>>, vector<1x2x16xbf16>
    %12 = vector.shape_cast %11 : vector<1x2x16xbf16> to vector<2x16xbf16>
    %cst_7 = arith.constant dense<0.000000e+00> : vector<2x512xf32>
    %13 = tpu.matmul %12, %0, %cst_7 {dimension_numbers = #tpu.dot_dimension_numbers<[1], [0], [0], [1], [0, 0, 1, 1], [], []>} : vector<2x16xbf16>, vector<16x512xbf16>, vector<2x512xf32> -> vector<2x512xf32>
    %14 = arith.truncf %13 : vector<2x512xf32> to vector<2x512xbf16>
    %15 = arith.index_cast %c1_i32 : i32 to index
    %c0_8 = arith.constant 0 : index
    %c0_9 = arith.constant 0 : index
    %16 = vector.load %arg8[%15, %c0_8, %c0_9] : memref<8x2x512xbf16, #tpu.memory_space<vmem>>, vector<1x2x512xbf16>
    %17 = vector.shape_cast %16 : vector<1x2x512xbf16> to vector<2x512xbf16>
    %18 = vector.shape_cast %14 : vector<2x512xbf16> to vector<1x2x512xbf16>
    tpu.vector_store %arg8[%15, %c0_8, %c0_9], %18 {strides = array<i32>} : memref<8x2x512xbf16, #tpu.memory_space<vmem>>, vector<1x2x512xbf16>,
    %c2_i32 = arith.constant 2 : i32
    %19 = arith.index_cast %c2_i32 : i32 to index
    %c0_10 = arith.constant 0 : index
    %c0_11 = arith.constant 0 : index
    %20 = vector.load %arg1[%19, %c0_10, %c0_11] : memref<8x2x16xbf16, #tpu.memory_space<vmem>>, vector<1x2x16xbf16>
    %21 = vector.shape_cast %20 : vector<1x2x16xbf16> to vector<2x16xbf16>
    %cst_12 = arith.constant dense<0.000000e+00> : vector<2x512xf32>
    %22 = tpu.matmul %21, %0, %cst_12 {dimension_numbers = #tpu.dot_dimension_numbers<[1], [0], [0], [1], [0, 0, 1, 1], [], []>} : vector<2x16xbf16>, vector<16x512xbf16>, vector<2x512xf32> -> vector<2x512xf32>
    %23 = arith.truncf %22 : vector<2x512xf32> to vector<2x512xbf16>
    %24 = arith.index_cast %c2_i32 : i32 to index
    %c0_13 = arith.constant 0 : index
    %c0_14 = arith.constant 0 : index
    %25 = vector.load %arg8[%24, %c0_13, %c0_14] : memref<8x2x512xbf16, #tpu.memory_space<vmem>>, vector<1x2x512xbf16>
    %26 = vector.shape_cast %25 : vector<1x2x512xbf16> to vector<2x512xbf16>
    %27 = vector.shape_cast %23 : vector<2x512xbf16> to vector<1x2x512xbf16>
    tpu.vector_store %arg8[%24, %c0_13, %c0_14], %27 {strides = array<i32>} : memref<8x2x512xbf16, #tpu.memory_space<vmem>>, vector<1x2x512xbf16>,
    %c3_i32 = arith.constant 3 : i32
    %28 = arith.index_cast %c3_i32 : i32 to index
    %c0_15 = arith.constant 0 : index
    %c0_16 = arith.constant 0 : index
    %29 = vector.load %arg1[%28, %c0_15, %c0_16] : memref<8x2x16xbf16, #tpu.memory_space<vmem>>, vector<1x2x16xbf16>
    %30 = vector.shape_cast %29 : vector<1x2x16xbf16> to vector<2x16xbf16>
    %cst_17 = arith.constant dense<0.000000e+00> : vector<2x512xf32>
    %31 = tpu.matmul %30, %0, %cst_17 {dimension_numbers = #tpu.dot_dimension_numbers<[1], [0], [0], [1], [0, 0, 1, 1], [], []>} : vector<2x16xbf16>, vector<16x512xbf16>, vector<2x512xf32> -> vector<2x512xf32>
    %32 = arith.truncf %31 : vector<2x512xf32> to vector<2x512xbf16>
    %33 = arith.index_cast %c3_i32 : i32 to index
    %c0_18 = arith.constant 0 : index
    %c0_19 = arith.constant 0 : index
    %34 = vector.load %arg8[%33, %c0_18, %c0_19] : memref<8x2x512xbf16, #tpu.memory_space<vmem>>, vector<1x2x512xbf16>
    %35 = vector.shape_cast %34 : vector<1x2x512xbf16> to vector<2x512xbf16>
    %36 = vector.shape_cast %32 : vector<2x512xbf16> to vector<1x2x512xbf16>
    tpu.vector_store %arg8[%33, %c0_18, %c0_19], %36 {strides = array<i32>} : memref<8x2x512xbf16, #tpu.memory_space<vmem>>, vector<1x2x512xbf16>,
    %c4_i32 = arith.constant 4 : i32
    %37 = arith.index_cast %c4_i32 : i32 to index
    %c0_20 = arith.constant 0 : index
    %c0_21 = arith.constant 0 : index
    %38 = vector.load %arg1[%37, %c0_20, %c0_21] : memref<8x2x16xbf16, #tpu.memory_space<vmem>>, vector<1x2x16xbf16>
    %39 = vector.shape_cast %38 : vector<1x2x16xbf16> to vector<2x16xbf16>
    %cst_22 = arith.constant dense<0.000000e+00> : vector<2x512xf32>
    %40 = tpu.matmul %39, %0, %cst_22 {dimension_numbers = #tpu.dot_dimension_numbers<[1], [0], [0], [1], [0, 0, 1, 1], [], []>} : vector<2x16xbf16>, vector<16x512xbf16>, vector<2x512xf32> -> vector<2x512xf32>
    %41 = arith.truncf %40 : vector<2x512xf32> to vector<2x512xbf16>
    %42 = arith.index_cast %c4_i32 : i32 to index
    %c0_23 = arith.constant 0 : index
    %c0_24 = arith.constant 0 : index
    %43 = vector.load %arg8[%42, %c0_23, %c0_24] : memref<8x2x512xbf16, #tpu.memory_space<vmem>>, vector<1x2x512xbf16>
    %44 = vector.shape_cast %43 : vector<1x2x512xbf16> to vector<2x512xbf16>
    %45 = vector.shape_cast %41 : vector<2x512xbf16> to vector<1x2x512xbf16>
    tpu.vector_store %arg8[%42, %c0_23, %c0_24], %45 {strides = array<i32>} : memref<8x2x512xbf16, #tpu.memory_space<vmem>>, vector<1x2x512xbf16>,
    %c5_i32 = arith.constant 5 : i32
    %46 = arith.index_cast %c5_i32 : i32 to index
    %c0_25 = arith.constant 0 : index
    %c0_26 = arith.constant 0 : index
    %47 = vector.load %arg1[%46, %c0_25, %c0_26] : memref<8x2x16xbf16, #tpu.memory_space<vmem>>, vector<1x2x16xbf16>
    %48 = vector.shape_cast %47 : vector<1x2x16xbf16> to vector<2x16xbf16>
    %cst_27 = arith.constant dense<0.000000e+00> : vector<2x512xf32>
    %49 = tpu.matmul %48, %0, %cst_27 {dimension_numbers = #tpu.dot_dimension_numbers<[1], [0], [0], [1], [0, 0, 1, 1], [], []>} : vector<2x16xbf16>, vector<16x512xbf16>, vector<2x512xf32> -> vector<2x512xf32>
    %50 = arith.truncf %49 : vector<2x512xf32> to vector<2x512xbf16>
    %51 = arith.index_cast %c5_i32 : i32 to index
    %c0_28 = arith.constant 0 : index
    %c0_29 = arith.constant 0 : index
    %52 = vector.load %arg8[%51, %c0_28, %c0_29] : memref<8x2x512xbf16, #tpu.memory_space<vmem>>, vector<1x2x512xbf16>
    %53 = vector.shape_cast %52 : vector<1x2x512xbf16> to vector<2x512xbf16>
    %54 = vector.shape_cast %50 : vector<2x512xbf16> to vector<1x2x512xbf16>
    tpu.vector_store %arg8[%51, %c0_28, %c0_29], %54 {strides = array<i32>} : memref<8x2x512xbf16, #tpu.memory_space<vmem>>, vector<1x2x512xbf16>,
    %c6_i32 = arith.constant 6 : i32
    %55 = arith.index_cast %c6_i32 : i32 to index
    %c0_30 = arith.constant 0 : index
    %c0_31 = arith.constant 0 : index
    %56 = vector.load %arg1[%55, %c0_30, %c0_31] : memref<8x2x16xbf16, #tpu.memory_space<vmem>>, vector<1x2x16xbf16>
    %57 = vector.shape_cast %56 : vector<1x2x16xbf16> to vector<2x16xbf16>
    %cst_32 = arith.constant dense<0.000000e+00> : vector<2x512xf32>
    %58 = tpu.matmul %57, %0, %cst_32 {dimension_numbers = #tpu.dot_dimension_numbers<[1], [0], [0], [1], [0, 0, 1, 1], [], []>} : vector<2x16xbf16>, vector<16x512xbf16>, vector<2x512xf32> -> vector<2x512xf32>
    %59 = arith.truncf %58 : vector<2x512xf32> to vector<2x512xbf16>
    %60 = arith.index_cast %c6_i32 : i32 to index
    %c0_33 = arith.constant 0 : index
    %c0_34 = arith.constant 0 : index
    %61 = vector.load %arg8[%60, %c0_33, %c0_34] : memref<8x2x512xbf16, #tpu.memory_space<vmem>>, vector<1x2x512xbf16>
    %62 = vector.shape_cast %61 : vector<1x2x512xbf16> to vector<2x512xbf16>
    %63 = vector.shape_cast %59 : vector<2x512xbf16> to vector<1x2x512xbf16>
    tpu.vector_store %arg8[%60, %c0_33, %c0_34], %63 {strides = array<i32>} : memref<8x2x512xbf16, #tpu.memory_space<vmem>>, vector<1x2x512xbf16>,
    %c7_i32 = arith.constant 7 : i32
    %64 = arith.index_cast %c7_i32 : i32 to index
    %c0_35 = arith.constant 0 : index
    %c0_36 = arith.constant 0 : index
    %65 = vector.load %arg1[%64, %c0_35, %c0_36] : memref<8x2x16xbf16, #tpu.memory_space<vmem>>, vector<1x2x16xbf16>
    %66 = vector.shape_cast %65 : vector<1x2x16xbf16> to vector<2x16xbf16>
    %cst_37 = arith.constant dense<0.000000e+00> : vector<2x512xf32>
    %67 = tpu.matmul %66, %0, %cst_37 {dimension_numbers = #tpu.dot_dimension_numbers<[1], [0], [0], [1], [0, 0, 1, 1], [], []>} : vector<2x16xbf16>, vector<16x512xbf16>, vector<2x512xf32> -> vector<2x512xf32>
    %68 = arith.truncf %67 : vector<2x512xf32> to vector<2x512xbf16>
    %69 = arith.index_cast %c7_i32 : i32 to index
    %c0_38 = arith.constant 0 : index
    %c0_39 = arith.constant 0 : index
    %70 = vector.load %arg8[%69, %c0_38, %c0_39] : memref<8x2x512xbf16, #tpu.memory_space<vmem>>, vector<1x2x512xbf16>
    %71 = vector.shape_cast %70 : vector<1x2x512xbf16> to vector<2x512xbf16>
    %72 = vector.shape_cast %68 : vector<2x512xbf16> to vector<1x2x512xbf16>
    tpu.vector_store %arg8[%69, %c0_38, %c0_39], %72 {strides = array<i32>} : memref<8x2x512xbf16, #tpu.memory_space<vmem>>, vector<1x2x512xbf16>,
    %c8_i32 = arith.constant 8 : i32
    %c0_40 = arith.constant 0 : index
    %c0_41 = arith.constant 0 : index
    %73 = vector.load %arg4[%c0_40, %c0_41] : memref<1x512xf32, #tpu.memory_space<vmem>>, vector<1x512xf32>
    %74 = vector.shape_cast %73 : vector<1x512xf32> to vector<1x512xf32>
    %75 = vector.broadcast %74 : vector<1x512xf32> to vector<2x512xf32>
    %cst_42 = arith.constant 0.000000e+00 : f32
    %76 = vector.broadcast %cst_42 : f32 to vector<2x128xf32>
    %cst_43 = arith.constant 0.000000e+00 : f32
    %77 = vector.broadcast %cst_43 : f32 to vector<2x128xf32>
    %c0_i32_44 = arith.constant 0 : i32
    %78 = arith.index_cast %c0_i32_44 : i32 to index
    %c0_45 = arith.constant 0 : index
    %c0_46 = arith.constant 0 : index
    %79 = vector.load %arg8[%78, %c0_45, %c0_46] : memref<8x2x512xbf16, #tpu.memory_space<vmem>>, vector<1x2x512xbf16>
    %80 = vector.shape_cast %79 : vector<1x2x512xbf16> to vector<2x512xbf16>
    %81 = arith.extf %80 : vector<2x512xbf16> to vector<2x512xf32>
    %82 = arith.addf %81, %75 : vector<2x512xf32>
    %83 = arith.truncf %76 : vector<2x128xf32> to vector<2x128xbf16>
    %c0_47 = arith.constant 0 : index
    %c0_48 = arith.constant 0 : index
    %84 = vector.load %arg3[%c0_47, %c0_48] : memref<128x512xbf16, #tpu.memory_space<vmem>>, vector<128x512xbf16>
    %cst_49 = arith.constant dense<0.000000e+00> : vector<2x512xf32>
    %85 = tpu.matmul %83, %84, %cst_49 {dimension_numbers = #tpu.dot_dimension_numbers<[1], [0], [0], [1], [0, 0, 1, 1], [], []>} : vector<2x128xbf16>, vector<128x512xbf16>, vector<2x512xf32> -> vector<2x512xf32>
    %86 = arith.addf %82, %85 : vector<2x512xf32>
    %87 = vector.extract_strided_slice %86 {offsets = [0, 0], sizes = [2, 128], strides = [1, 1]} : vector<2x512xf32> to vector<2x128xf32>
    %88 = arith.negf %87 : vector<2x128xf32>
    %89 = math.exp %88 : vector<2x128xf32>
    %cst_50 = arith.constant 1.000000e+00 : f32
    %90 = vector.broadcast %cst_50 : f32 to vector<2x128xf32>
    %91 = arith.addf %90, %89 : vector<2x128xf32>
    %92 = arith.divf %90, %91 : vector<2x128xf32>
    %93 = vector.extract_strided_slice %86 {offsets = [0, 128], sizes = [2, 128], strides = [1, 1]} : vector<2x512xf32> to vector<2x128xf32>
    %94 = arith.negf %93 : vector<2x128xf32>
    %95 = math.exp %94 : vector<2x128xf32>
    %cst_51 = arith.constant 1.000000e+00 : f32
    %96 = vector.broadcast %cst_51 : f32 to vector<2x128xf32>
    %97 = arith.addf %96, %95 : vector<2x128xf32>
    %98 = arith.divf %96, %97 : vector<2x128xf32>
    %99 = vector.extract_strided_slice %86 {offsets = [0, 256], sizes = [2, 128], strides = [1, 1]} : vector<2x512xf32> to vector<2x128xf32>
    %100 = math.tanh %99 : vector<2x128xf32>
    %101 = vector.extract_strided_slice %86 {offsets = [0, 384], sizes = [2, 128], strides = [1, 1]} : vector<2x512xf32> to vector<2x128xf32>
    %102 = arith.negf %101 : vector<2x128xf32>
    %103 = math.exp %102 : vector<2x128xf32>
    %cst_52 = arith.constant 1.000000e+00 : f32
    %104 = vector.broadcast %cst_52 : f32 to vector<2x128xf32>
    %105 = arith.addf %104, %103 : vector<2x128xf32>
    %106 = arith.divf %104, %105 : vector<2x128xf32>
    %107 = arith.mulf %98, %77 : vector<2x128xf32>
    %108 = arith.mulf %92, %100 : vector<2x128xf32>
    %109 = arith.addf %107, %108 : vector<2x128xf32>
    %110 = math.tanh %109 : vector<2x128xf32>
    %111 = arith.mulf %106, %110 : vector<2x128xf32>
    %c1_i32_53 = arith.constant 1 : i32
    %112 = arith.index_cast %c1_i32_53 : i32 to index
    %c0_54 = arith.constant 0 : index
    %c0_55 = arith.constant 0 : index
    %113 = vector.load %arg8[%112, %c0_54, %c0_55] : memref<8x2x512xbf16, #tpu.memory_space<vmem>>, vector<1x2x512xbf16>
    %114 = vector.shape_cast %113 : vector<1x2x512xbf16> to vector<2x512xbf16>
    %115 = arith.extf %114 : vector<2x512xbf16> to vector<2x512xf32>
    %116 = arith.addf %115, %75 : vector<2x512xf32>
    %117 = arith.truncf %111 : vector<2x128xf32> to vector<2x128xbf16>
    %c0_56 = arith.constant 0 : index
    %c0_57 = arith.constant 0 : index
    %118 = vector.load %arg3[%c0_56, %c0_57] : memref<128x512xbf16, #tpu.memory_space<vmem>>, vector<128x512xbf16>
    %cst_58 = arith.constant dense<0.000000e+00> : vector<2x512xf32>
    %119 = tpu.matmul %117, %118, %cst_58 {dimension_numbers = #tpu.dot_dimension_numbers<[1], [0], [0], [1], [0, 0, 1, 1], [], []>} : vector<2x128xbf16>, vector<128x512xbf16>, vector<2x512xf32> -> vector<2x512xf32>
    %120 = arith.addf %116, %119 : vector<2x512xf32>
    %121 = vector.extract_strided_slice %120 {offsets = [0, 0], sizes = [2, 128], strides = [1, 1]} : vector<2x512xf32> to vector<2x128xf32>
    %122 = arith.negf %121 : vector<2x128xf32>
    %123 = math.exp %122 : vector<2x128xf32>
    %cst_59 = arith.constant 1.000000e+00 : f32
    %124 = vector.broadcast %cst_59 : f32 to vector<2x128xf32>
    %125 = arith.addf %124, %123 : vector<2x128xf32>
    %126 = arith.divf %124, %125 : vector<2x128xf32>
    %127 = vector.extract_strided_slice %120 {offsets = [0, 128], sizes = [2, 128], strides = [1, 1]} : vector<2x512xf32> to vector<2x128xf32>
    %128 = arith.negf %127 : vector<2x128xf32>
    %129 = math.exp %128 : vector<2x128xf32>
    %cst_60 = arith.constant 1.000000e+00 : f32
    %130 = vector.broadcast %cst_60 : f32 to vector<2x128xf32>
    %131 = arith.addf %130, %129 : vector<2x128xf32>
    %132 = arith.divf %130, %131 : vector<2x128xf32>
    %133 = vector.extract_strided_slice %120 {offsets = [0, 256], sizes = [2, 128], strides = [1, 1]} : vector<2x512xf32> to vector<2x128xf32>
    %134 = math.tanh %133 : vector<2x128xf32>
    %135 = vector.extract_strided_slice %120 {offsets = [0, 384], sizes = [2, 128], strides = [1, 1]} : vector<2x512xf32> to vector<2x128xf32>
    %136 = arith.negf %135 : vector<2x128xf32>
    %137 = math.exp %136 : vector<2x128xf32>
    %cst_61 = arith.constant 1.000000e+00 : f32
    %138 = vector.broadcast %cst_61 : f32 to vector<2x128xf32>
    %139 = arith.addf %138, %137 : vector<2x128xf32>
    %140 = arith.divf %138, %139 : vector<2x128xf32>
    %141 = arith.mulf %132, %109 : vector<2x128xf32>
    %142 = arith.mulf %126, %134 : vector<2x128xf32>
    %143 = arith.addf %141, %142 : vector<2x128xf32>
    %144 = math.tanh %143 : vector<2x128xf32>
    %145 = arith.mulf %140, %144 : vector<2x128xf32>
    %c2_i32_62 = arith.constant 2 : i32
    %146 = arith.index_cast %c2_i32_62 : i32 to index
    %c0_63 = arith.constant 0 : index
    %c0_64 = arith.constant 0 : index
    %147 = vector.load %arg8[%146, %c0_63, %c0_64] : memref<8x2x512xbf16, #tpu.memory_space<vmem>>, vector<1x2x512xbf16>
    %148 = vector.shape_cast %147 : vector<1x2x512xbf16> to vector<2x512xbf16>
    %149 = arith.extf %148 : vector<2x512xbf16> to vector<2x512xf32>
    %150 = arith.addf %149, %75 : vector<2x512xf32>
    %151 = arith.truncf %145 : vector<2x128xf32> to vector<2x128xbf16>
    %c0_65 = arith.constant 0 : index
    %c0_66 = arith.constant 0 : index
    %152 = vector.load %arg3[%c0_65, %c0_66] : memref<128x512xbf16, #tpu.memory_space<vmem>>, vector<128x512xbf16>
    %cst_67 = arith.constant dense<0.000000e+00> : vector<2x512xf32>
    %153 = tpu.matmul %151, %152, %cst_67 {dimension_numbers = #tpu.dot_dimension_numbers<[1], [0], [0], [1], [0, 0, 1, 1], [], []>} : vector<2x128xbf16>, vector<128x512xbf16>, vector<2x512xf32> -> vector<2x512xf32>
    %154 = arith.addf %150, %153 : vector<2x512xf32>
    %155 = vector.extract_strided_slice %154 {offsets = [0, 0], sizes = [2, 128], strides = [1, 1]} : vector<2x512xf32> to vector<2x128xf32>
    %156 = arith.negf %155 : vector<2x128xf32>
    %157 = math.exp %156 : vector<2x128xf32>
    %cst_68 = arith.constant 1.000000e+00 : f32
    %158 = vector.broadcast %cst_68 : f32 to vector<2x128xf32>
    %159 = arith.addf %158, %157 : vector<2x128xf32>
    %160 = arith.divf %158, %159 : vector<2x128xf32>
    %161 = vector.extract_strided_slice %154 {offsets = [0, 128], sizes = [2, 128], strides = [1, 1]} : vector<2x512xf32> to vector<2x128xf32>
    %162 = arith.negf %161 : vector<2x128xf32>
    %163 = math.exp %162 : vector<2x128xf32>
    %cst_69 = arith.constant 1.000000e+00 : f32
    %164 = vector.broadcast %cst_69 : f32 to vector<2x128xf32>
    %165 = arith.addf %164, %163 : vector<2x128xf32>
    %166 = arith.divf %164, %165 : vector<2x128xf32>
    %167 = vector.extract_strided_slice %154 {offsets = [0, 256], sizes = [2, 128], strides = [1, 1]} : vector<2x512xf32> to vector<2x128xf32>
    %168 = math.tanh %167 : vector<2x128xf32>
    %169 = vector.extract_strided_slice %154 {offsets = [0, 384], sizes = [2, 128], strides = [1, 1]} : vector<2x512xf32> to vector<2x128xf32>
    %170 = arith.negf %169 : vector<2x128xf32>
    %171 = math.exp %170 : vector<2x128xf32>
    %cst_70 = arith.constant 1.000000e+00 : f32
    %172 = vector.broadcast %cst_70 : f32 to vector<2x128xf32>
    %173 = arith.addf %172, %171 : vector<2x128xf32>
    %174 = arith.divf %172, %173 : vector<2x128xf32>
    %175 = arith.mulf %166, %143 : vector<2x128xf32>
    %176 = arith.mulf %160, %168 : vector<2x128xf32>
    %177 = arith.addf %175, %176 : vector<2x128xf32>
    %178 = math.tanh %177 : vector<2x128xf32>
    %179 = arith.mulf %174, %178 : vector<2x128xf32>
    %c3_i32_71 = arith.constant 3 : i32
    %180 = arith.index_cast %c3_i32_71 : i32 to index
    %c0_72 = arith.constant 0 : index
    %c0_73 = arith.constant 0 : index
    %181 = vector.load %arg8[%180, %c0_72, %c0_73] : memref<8x2x512xbf16, #tpu.memory_space<vmem>>, vector<1x2x512xbf16>
    %182 = vector.shape_cast %181 : vector<1x2x512xbf16> to vector<2x512xbf16>
    %183 = arith.extf %182 : vector<2x512xbf16> to vector<2x512xf32>
    %184 = arith.addf %183, %75 : vector<2x512xf32>
    %185 = arith.truncf %179 : vector<2x128xf32> to vector<2x128xbf16>
    %c0_74 = arith.constant 0 : index
    %c0_75 = arith.constant 0 : index
    %186 = vector.load %arg3[%c0_74, %c0_75] : memref<128x512xbf16, #tpu.memory_space<vmem>>, vector<128x512xbf16>
    %cst_76 = arith.constant dense<0.000000e+00> : vector<2x512xf32>
    %187 = tpu.matmul %185, %186, %cst_76 {dimension_numbers = #tpu.dot_dimension_numbers<[1], [0], [0], [1], [0, 0, 1, 1], [], []>} : vector<2x128xbf16>, vector<128x512xbf16>, vector<2x512xf32> -> vector<2x512xf32>
    %188 = arith.addf %184, %187 : vector<2x512xf32>
    %189 = vector.extract_strided_slice %188 {offsets = [0, 0], sizes = [2, 128], strides = [1, 1]} : vector<2x512xf32> to vector<2x128xf32>
    %190 = arith.negf %189 : vector<2x128xf32>
    %191 = math.exp %190 : vector<2x128xf32>
    %cst_77 = arith.constant 1.000000e+00 : f32
    %192 = vector.broadcast %cst_77 : f32 to vector<2x128xf32>
    %193 = arith.addf %192, %191 : vector<2x128xf32>
    %194 = arith.divf %192, %193 : vector<2x128xf32>
    %195 = vector.extract_strided_slice %188 {offsets = [0, 128], sizes = [2, 128], strides = [1, 1]} : vector<2x512xf32> to vector<2x128xf32>
    %196 = arith.negf %195 : vector<2x128xf32>
    %197 = math.exp %196 : vector<2x128xf32>
    %cst_78 = arith.constant 1.000000e+00 : f32
    %198 = vector.broadcast %cst_78 : f32 to vector<2x128xf32>
    %199 = arith.addf %198, %197 : vector<2x128xf32>
    %200 = arith.divf %198, %199 : vector<2x128xf32>
    %201 = vector.extract_strided_slice %188 {offsets = [0, 256], sizes = [2, 128], strides = [1, 1]} : vector<2x512xf32> to vector<2x128xf32>
    %202 = math.tanh %201 : vector<2x128xf32>
    %203 = vector.extract_strided_slice %188 {offsets = [0, 384], sizes = [2, 128], strides = [1, 1]} : vector<2x512xf32> to vector<2x128xf32>
    %204 = arith.negf %203 : vector<2x128xf32>
    %205 = math.exp %204 : vector<2x128xf32>
    %cst_79 = arith.constant 1.000000e+00 : f32
    %206 = vector.broadcast %cst_79 : f32 to vector<2x128xf32>
    %207 = arith.addf %206, %205 : vector<2x128xf32>
    %208 = arith.divf %206, %207 : vector<2x128xf32>
    %209 = arith.mulf %200, %177 : vector<2x128xf32>
    %210 = arith.mulf %194, %202 : vector<2x128xf32>
    %211 = arith.addf %209, %210 : vector<2x128xf32>
    %212 = math.tanh %211 : vector<2x128xf32>
    %213 = arith.mulf %208, %212 : vector<2x128xf32>
    %c4_i32_80 = arith.constant 4 : i32
    %214 = arith.index_cast %c4_i32_80 : i32 to index
    %c0_81 = arith.constant 0 : index
    %c0_82 = arith.constant 0 : index
    %215 = vector.load %arg8[%214, %c0_81, %c0_82] : memref<8x2x512xbf16, #tpu.memory_space<vmem>>, vector<1x2x512xbf16>
    %216 = vector.shape_cast %215 : vector<1x2x512xbf16> to vector<2x512xbf16>
    %217 = arith.extf %216 : vector<2x512xbf16> to vector<2x512xf32>
    %218 = arith.addf %217, %75 : vector<2x512xf32>
    %219 = arith.truncf %213 : vector<2x128xf32> to vector<2x128xbf16>
    %c0_83 = arith.constant 0 : index
    %c0_84 = arith.constant 0 : index
    %220 = vector.load %arg3[%c0_83, %c0_84] : memref<128x512xbf16, #tpu.memory_space<vmem>>, vector<128x512xbf16>
    %cst_85 = arith.constant dense<0.000000e+00> : vector<2x512xf32>
    %221 = tpu.matmul %219, %220, %cst_85 {dimension_numbers = #tpu.dot_dimension_numbers<[1], [0], [0], [1], [0, 0, 1, 1], [], []>} : vector<2x128xbf16>, vector<128x512xbf16>, vector<2x512xf32> -> vector<2x512xf32>
    %222 = arith.addf %218, %221 : vector<2x512xf32>
    %223 = vector.extract_strided_slice %222 {offsets = [0, 0], sizes = [2, 128], strides = [1, 1]} : vector<2x512xf32> to vector<2x128xf32>
    %224 = arith.negf %223 : vector<2x128xf32>
    %225 = math.exp %224 : vector<2x128xf32>
    %cst_86 = arith.constant 1.000000e+00 : f32
    %226 = vector.broadcast %cst_86 : f32 to vector<2x128xf32>
    %227 = arith.addf %226, %225 : vector<2x128xf32>
    %228 = arith.divf %226, %227 : vector<2x128xf32>
    %229 = vector.extract_strided_slice %222 {offsets = [0, 128], sizes = [2, 128], strides = [1, 1]} : vector<2x512xf32> to vector<2x128xf32>
    %230 = arith.negf %229 : vector<2x128xf32>
    %231 = math.exp %230 : vector<2x128xf32>
    %cst_87 = arith.constant 1.000000e+00 : f32
    %232 = vector.broadcast %cst_87 : f32 to vector<2x128xf32>
    %233 = arith.addf %232, %231 : vector<2x128xf32>
    %234 = arith.divf %232, %233 : vector<2x128xf32>
    %235 = vector.extract_strided_slice %222 {offsets = [0, 256], sizes = [2, 128], strides = [1, 1]} : vector<2x512xf32> to vector<2x128xf32>
    %236 = math.tanh %235 : vector<2x128xf32>
    %237 = vector.extract_strided_slice %222 {offsets = [0, 384], sizes = [2, 128], strides = [1, 1]} : vector<2x512xf32> to vector<2x128xf32>
    %238 = arith.negf %237 : vector<2x128xf32>
    %239 = math.exp %238 : vector<2x128xf32>
    %cst_88 = arith.constant 1.000000e+00 : f32
    %240 = vector.broadcast %cst_88 : f32 to vector<2x128xf32>
    %241 = arith.addf %240, %239 : vector<2x128xf32>
    %242 = arith.divf %240, %241 : vector<2x128xf32>
    %243 = arith.mulf %234, %211 : vector<2x128xf32>
    %244 = arith.mulf %228, %236 : vector<2x128xf32>
    %245 = arith.addf %243, %244 : vector<2x128xf32>
    %246 = math.tanh %245 : vector<2x128xf32>
    %247 = arith.mulf %242, %246 : vector<2x128xf32>
    %c5_i32_89 = arith.constant 5 : i32
    %248 = arith.index_cast %c5_i32_89 : i32 to index
    %c0_90 = arith.constant 0 : index
    %c0_91 = arith.constant 0 : index
    %249 = vector.load %arg8[%248, %c0_90, %c0_91] : memref<8x2x512xbf16, #tpu.memory_space<vmem>>, vector<1x2x512xbf16>
    %250 = vector.shape_cast %249 : vector<1x2x512xbf16> to vector<2x512xbf16>
    %251 = arith.extf %250 : vector<2x512xbf16> to vector<2x512xf32>
    %252 = arith.addf %251, %75 : vector<2x512xf32>
    %253 = arith.truncf %247 : vector<2x128xf32> to vector<2x128xbf16>
    %c0_92 = arith.constant 0 : index
    %c0_93 = arith.constant 0 : index
    %254 = vector.load %arg3[%c0_92, %c0_93] : memref<128x512xbf16, #tpu.memory_space<vmem>>, vector<128x512xbf16>
    %cst_94 = arith.constant dense<0.000000e+00> : vector<2x512xf32>
    %255 = tpu.matmul %253, %254, %cst_94 {dimension_numbers = #tpu.dot_dimension_numbers<[1], [0], [0], [1], [0, 0, 1, 1], [], []>} : vector<2x128xbf16>, vector<128x512xbf16>, vector<2x512xf32> -> vector<2x512xf32>
    %256 = arith.addf %252, %255 : vector<2x512xf32>
    %257 = vector.extract_strided_slice %256 {offsets = [0, 0], sizes = [2, 128], strides = [1, 1]} : vector<2x512xf32> to vector<2x128xf32>
    %258 = arith.negf %257 : vector<2x128xf32>
    %259 = math.exp %258 : vector<2x128xf32>
    %cst_95 = arith.constant 1.000000e+00 : f32
    %260 = vector.broadcast %cst_95 : f32 to vector<2x128xf32>
    %261 = arith.addf %260, %259 : vector<2x128xf32>
    %262 = arith.divf %260, %261 : vector<2x128xf32>
    %263 = vector.extract_strided_slice %256 {offsets = [0, 128], sizes = [2, 128], strides = [1, 1]} : vector<2x512xf32> to vector<2x128xf32>
    %264 = arith.negf %263 : vector<2x128xf32>
    %265 = math.exp %264 : vector<2x128xf32>
    %cst_96 = arith.constant 1.000000e+00 : f32
    %266 = vector.broadcast %cst_96 : f32 to vector<2x128xf32>
    %267 = arith.addf %266, %265 : vector<2x128xf32>
    %268 = arith.divf %266, %267 : vector<2x128xf32>
    %269 = vector.extract_strided_slice %256 {offsets = [0, 256], sizes = [2, 128], strides = [1, 1]} : vector<2x512xf32> to vector<2x128xf32>
    %270 = math.tanh %269 : vector<2x128xf32>
    %271 = vector.extract_strided_slice %256 {offsets = [0, 384], sizes = [2, 128], strides = [1, 1]} : vector<2x512xf32> to vector<2x128xf32>
    %272 = arith.negf %271 : vector<2x128xf32>
    %273 = math.exp %272 : vector<2x128xf32>
    %cst_97 = arith.constant 1.000000e+00 : f32
    %274 = vector.broadcast %cst_97 : f32 to vector<2x128xf32>
    %275 = arith.addf %274, %273 : vector<2x128xf32>
    %276 = arith.divf %274, %275 : vector<2x128xf32>
    %277 = arith.mulf %268, %245 : vector<2x128xf32>
    %278 = arith.mulf %262, %270 : vector<2x128xf32>
    %279 = arith.addf %277, %278 : vector<2x128xf32>
    %280 = math.tanh %279 : vector<2x128xf32>
    %281 = arith.mulf %276, %280 : vector<2x128xf32>
    %c6_i32_98 = arith.constant 6 : i32
    %282 = arith.index_cast %c6_i32_98 : i32 to index
    %c0_99 = arith.constant 0 : index
    %c0_100 = arith.constant 0 : index
    %283 = vector.load %arg8[%282, %c0_99, %c0_100] : memref<8x2x512xbf16, #tpu.memory_space<vmem>>, vector<1x2x512xbf16>
    %284 = vector.shape_cast %283 : vector<1x2x512xbf16> to vector<2x512xbf16>
    %285 = arith.extf %284 : vector<2x512xbf16> to vector<2x512xf32>
    %286 = arith.addf %285, %75 : vector<2x512xf32>
    %287 = arith.truncf %281 : vector<2x128xf32> to vector<2x128xbf16>
    %c0_101 = arith.constant 0 : index
    %c0_102 = arith.constant 0 : index
    %288 = vector.load %arg3[%c0_101, %c0_102] : memref<128x512xbf16, #tpu.memory_space<vmem>>, vector<128x512xbf16>
    %cst_103 = arith.constant dense<0.000000e+00> : vector<2x512xf32>
    %289 = tpu.matmul %287, %288, %cst_103 {dimension_numbers = #tpu.dot_dimension_numbers<[1], [0], [0], [1], [0, 0, 1, 1], [], []>} : vector<2x128xbf16>, vector<128x512xbf16>, vector<2x512xf32> -> vector<2x512xf32>
    %290 = arith.addf %286, %289 : vector<2x512xf32>
    %291 = vector.extract_strided_slice %290 {offsets = [0, 0], sizes = [2, 128], strides = [1, 1]} : vector<2x512xf32> to vector<2x128xf32>
    %292 = arith.negf %291 : vector<2x128xf32>
    %293 = math.exp %292 : vector<2x128xf32>
    %cst_104 = arith.constant 1.000000e+00 : f32
    %294 = vector.broadcast %cst_104 : f32 to vector<2x128xf32>
    %295 = arith.addf %294, %293 : vector<2x128xf32>
    %296 = arith.divf %294, %295 : vector<2x128xf32>
    %297 = vector.extract_strided_slice %290 {offsets = [0, 128], sizes = [2, 128], strides = [1, 1]} : vector<2x512xf32> to vector<2x128xf32>
    %298 = arith.negf %297 : vector<2x128xf32>
    %299 = math.exp %298 : vector<2x128xf32>
    %cst_105 = arith.constant 1.000000e+00 : f32
    %300 = vector.broadcast %cst_105 : f32 to vector<2x128xf32>
    %301 = arith.addf %300, %299 : vector<2x128xf32>
    %302 = arith.divf %300, %301 : vector<2x128xf32>
    %303 = vector.extract_strided_slice %290 {offsets = [0, 256], sizes = [2, 128], strides = [1, 1]} : vector<2x512xf32> to vector<2x128xf32>
    %304 = math.tanh %303 : vector<2x128xf32>
    %305 = vector.extract_strided_slice %290 {offsets = [0, 384], sizes = [2, 128], strides = [1, 1]} : vector<2x512xf32> to vector<2x128xf32>
    %306 = arith.negf %305 : vector<2x128xf32>
    %307 = math.exp %306 : vector<2x128xf32>
    %cst_106 = arith.constant 1.000000e+00 : f32
    %308 = vector.broadcast %cst_106 : f32 to vector<2x128xf32>
    %309 = arith.addf %308, %307 : vector<2x128xf32>
    %310 = arith.divf %308, %309 : vector<2x128xf32>
    %311 = arith.mulf %302, %279 : vector<2x128xf32>
    %312 = arith.mulf %296, %304 : vector<2x128xf32>
    %313 = arith.addf %311, %312 : vector<2x128xf32>
    %314 = math.tanh %313 : vector<2x128xf32>
    %315 = arith.mulf %310, %314 : vector<2x128xf32>
    %c7_i32_107 = arith.constant 7 : i32
    %316 = arith.index_cast %c7_i32_107 : i32 to index
    %c0_108 = arith.constant 0 : index
    %c0_109 = arith.constant 0 : index
    %317 = vector.load %arg8[%316, %c0_108, %c0_109] : memref<8x2x512xbf16, #tpu.memory_space<vmem>>, vector<1x2x512xbf16>
    %318 = vector.shape_cast %317 : vector<1x2x512xbf16> to vector<2x512xbf16>
    %319 = arith.extf %318 : vector<2x512xbf16> to vector<2x512xf32>
    %320 = arith.addf %319, %75 : vector<2x512xf32>
    %321 = arith.truncf %315 : vector<2x128xf32> to vector<2x128xbf16>
    %c0_110 = arith.constant 0 : index
    %c0_111 = arith.constant 0 : index
    %322 = vector.load %arg3[%c0_110, %c0_111] : memref<128x512xbf16, #tpu.memory_space<vmem>>, vector<128x512xbf16>
    %cst_112 = arith.constant dense<0.000000e+00> : vector<2x512xf32>
    %323 = tpu.matmul %321, %322, %cst_112 {dimension_numbers = #tpu.dot_dimension_numbers<[1], [0], [0], [1], [0, 0, 1, 1], [], []>} : vector<2x128xbf16>, vector<128x512xbf16>, vector<2x512xf32> -> vector<2x512xf32>
    %324 = arith.addf %320, %323 : vector<2x512xf32>
    %325 = vector.extract_strided_slice %324 {offsets = [0, 0], sizes = [2, 128], strides = [1, 1]} : vector<2x512xf32> to vector<2x128xf32>
    %326 = arith.negf %325 : vector<2x128xf32>
    %327 = math.exp %326 : vector<2x128xf32>
    %cst_113 = arith.constant 1.000000e+00 : f32
    %328 = vector.broadcast %cst_113 : f32 to vector<2x128xf32>
    %329 = arith.addf %328, %327 : vector<2x128xf32>
    %330 = arith.divf %328, %329 : vector<2x128xf32>
    %331 = vector.extract_strided_slice %324 {offsets = [0, 128], sizes = [2, 128], strides = [1, 1]} : vector<2x512xf32> to vector<2x128xf32>
    %332 = arith.negf %331 : vector<2x128xf32>
    %333 = math.exp %332 : vector<2x128xf32>
    %cst_114 = arith.constant 1.000000e+00 : f32
    %334 = vector.broadcast %cst_114 : f32 to vector<2x128xf32>
    %335 = arith.addf %334, %333 : vector<2x128xf32>
    %336 = arith.divf %334, %335 : vector<2x128xf32>
    %337 = vector.extract_strided_slice %324 {offsets = [0, 256], sizes = [2, 128], strides = [1, 1]} : vector<2x512xf32> to vector<2x128xf32>
    %338 = math.tanh %337 : vector<2x128xf32>
    %339 = vector.extract_strided_slice %324 {offsets = [0, 384], sizes = [2, 128], strides = [1, 1]} : vector<2x512xf32> to vector<2x128xf32>
    %340 = arith.negf %339 : vector<2x128xf32>
    %341 = math.exp %340 : vector<2x128xf32>
    %cst_115 = arith.constant 1.000000e+00 : f32
    %342 = vector.broadcast %cst_115 : f32 to vector<2x128xf32>
    %343 = arith.addf %342, %341 : vector<2x128xf32>
    %344 = arith.divf %342, %343 : vector<2x128xf32>
    %345 = arith.mulf %336, %313 : vector<2x128xf32>
    %346 = arith.mulf %330, %338 : vector<2x128xf32>
    %347 = arith.addf %345, %346 : vector<2x128xf32>
    %348 = math.tanh %347 : vector<2x128xf32>
    %349 = arith.mulf %344, %348 : vector<2x128xf32>
    %c8_i32_116 = arith.constant 8 : i32
    %350 = arith.truncf %349 : vector<2x128xf32> to vector<2x128xbf16>
    %c0_117 = arith.constant 0 : index
    %c0_118 = arith.constant 0 : index
    %351 = vector.load %arg5[%c0_117, %c0_118] : memref<128x128xbf16, #tpu.memory_space<vmem>>, vector<128x128xbf16>
    %cst_119 = arith.constant dense<0.000000e+00> : vector<2x128xf32>
    %352 = tpu.matmul %350, %351, %cst_119 {dimension_numbers = #tpu.dot_dimension_numbers<[1], [0], [0], [1], [0, 0, 1, 1], [], []>} : vector<2x128xbf16>, vector<128x128xbf16>, vector<2x128xf32> -> vector<2x128xf32>
    %c0_120 = arith.constant 0 : index
    %c0_121 = arith.constant 0 : index
    %353 = vector.load %arg6[%c0_120, %c0_121] : memref<1x128xf32, #tpu.memory_space<vmem>>, vector<1x128xf32>
    %354 = vector.broadcast %353 : vector<1x128xf32> to vector<2x128xf32>
    %355 = arith.addf %352, %354 : vector<2x128xf32>
    %c0_122 = arith.constant 0 : index
    %c0_123 = arith.constant 0 : index
    %356 = vector.load %arg7[%c0_122, %c0_123] : memref<2x128xf32, #tpu.memory_space<vmem>>, vector<2x128xf32>
    tpu.vector_store %arg7[%c0_122, %c0_123], %355 {strides = array<i32>} : memref<2x128xf32, #tpu.memory_space<vmem>>, vector<2x128xf32>,
    return
  }
  func.func @transform_0(%arg0: i32) -> (i32, i32, i32) {
    %c0_i32 = arith.constant 0 : i32
    %c0_i32_0 = arith.constant 0 : i32
    %c0_i32_1 = arith.constant 0 : i32
    return %c0_i32, %arg0, %c0_i32_0 : i32, i32, i32
  }
  func.func @transform_1(%arg0: i32) -> (i32, i32) {
    %c0_i32 = arith.constant 0 : i32
    %c0_i32_0 = arith.constant 0 : i32
    %c0_i32_1 = arith.constant 0 : i32
    return %c0_i32, %c0_i32_0 : i32, i32
  }
  func.func @transform_2(%arg0: i32) -> (i32, i32) {
    %c0_i32 = arith.constant 0 : i32
    %c0_i32_0 = arith.constant 0 : i32
    %c0_i32_1 = arith.constant 0 : i32
    return %c0_i32, %c0_i32_0 : i32, i32
  }
  func.func @transform_3(%arg0: i32) -> (i32, i32) {
    %c0_i32 = arith.constant 0 : i32
    %c0_i32_0 = arith.constant 0 : i32
    %c0_i32_1 = arith.constant 0 : i32
    return %c0_i32, %c0_i32_0 : i32, i32
  }
  func.func @transform_4(%arg0: i32) -> (i32, i32) {
    %c0_i32 = arith.constant 0 : i32
    %c0_i32_0 = arith.constant 0 : i32
    %c0_i32_1 = arith.constant 0 : i32
    return %c0_i32, %c0_i32_0 : i32, i32
  }
  func.func @transform_5(%arg0: i32) -> (i32, i32) {
    %c0_i32 = arith.constant 0 : i32
    %c0_i32_0 = arith.constant 0 : i32
    %c0_i32_1 = arith.constant 0 : i32
    return %c0_i32, %c0_i32_0 : i32, i32
  }
  func.func @transform_6(%arg0: i32) -> (i32, i32) {
    %c0_i32 = arith.constant 0 : i32
    %c0_i32_0 = arith.constant 0 : i32
    return %arg0, %c0_i32 : i32, i32
  }
}

</mosaic_0001>

<llo_original>
// kernel: tpu_custom_call.1
$region0: #{tpu_custom_call.1}
  #allocation0 [shape = 'u32[]', space=smem, size = 0x4, offset = 0x4, fixed_abs, tag = 'smem constant byte address 0x4 - core index']
  #allocation1 [shape = 'u32[72,128]{1,0:T(1,128)}', space=vmem, size = 0x9000, scoped, tag = 'internal scratch']
  #allocation2 [shape = 'bf16[8,2,512]{2,1,0:T(2,128)(2,1)}', space=vmem, size = 0x4000, scoped, tag = 'scratch operand']
  %s0 = inlined_call_operand.hbm [shape: bf16[8,2,16], index: 0, kind: input, shape index: {}]
  %s1 = inlined_call_operand.hbm [shape: bf16[16,512], index: 1, kind: input, shape index: {}]
  %s2 = inlined_call_operand.hbm [shape: bf16[128,512], index: 2, kind: input, shape index: {}]
  %s3 = inlined_call_operand.hbm [shape: f32[1,512], index: 3, kind: input, shape index: {}]
  %s4 = inlined_call_operand.hbm [shape: bf16[128,128], index: 4, kind: input, shape index: {}]
  %s5 = inlined_call_operand.vmem [shape: f32[1,128], index: 5, kind: input, shape index: {}]
  %s6 = inlined_call_operand.hbm [shape: f32[2,128], index: 6, kind: output, shape index: {}]
  %s7 = sld [smem:[#allocation0]]
  $region54: #{tpu_custom_call.1} parent=0
    _
  %s9 = ssub.s32 1, %s7
  %s10 = scalar_select 0, %s9, %s7
  $region1: #{tpu_custom_call.1} parent=0
    #allocation3 [shape = 'u8[4096]{0}', space=vmem, size = 0x1000, scoped, tag = 'input window, operand 0, single buffered']
    #allocation4 [shape = 's32[1]{0}', space=sflag, size = 0x4, scoped, tag = 'scoped memory for tpu_custom_call.1']
    #allocation5 [shape = 's32[1]{0}', space=sflag, size = 0x4, scoped, tag = 'scoped memory for tpu_custom_call.1']
    #allocation6 [shape = 'u8[16384]{0}', space=vmem, size = 0x4000, scoped, tag = 'input window, operand 1, single buffered']
    #allocation7 [shape = 's32[1]{0}', space=sflag, size = 0x4, scoped, tag = 'scoped memory for tpu_custom_call.1']
    #allocation8 [shape = 'u8[131072]{0}', space=vmem, size = 0x20000, scoped, tag = 'input window, operand 2, single buffered']
    #allocation9 [shape = 'u8[2048]{0}', space=vmem, size = 0x800, scoped, tag = 'input window, operand 3, single buffered']
    #allocation10 [shape = 's32[1]{0}', space=sflag, size = 0x4, scoped, tag = 'scoped memory for tpu_custom_call.1']
    #allocation11 [shape = 'u8[32768]{0}', space=vmem, size = 0x8000, scoped, tag = 'input window, operand 4, single buffered']
    #allocation12 [shape = 'u8[1024]{0}', space=vmem, size = 0x400, scoped, tag = 'output window, operand 0, single buffered']
    %11 = vsyncpa [#allocation4], 0
    %12 = vsyncpa [#allocation7], 0
    %13 = vsyncpa [#allocation10], 0
    %14 = vsyncpa [#allocation5], 0
    // Predicated region
    $region2: #{tpu_custom_call.1} parent=1 // pred_check
      _
    $region3: #{tpu_custom_call.1} parent=1 // pred_check_branch
      %16 = sbr.rel (0) target = $region5
    $region4: #{tpu_custom_call.1} parent=1 // pred_region
      %18 = vsyncadd [#allocation4], 0
      %s19 = sshll.u32 %s0, 4
      %s20 = int_to_ptr.hbm [resolvable:$true] %s19
      %s21 = sshll.u32 [#allocation3], 4
      %s22 = int_to_ptr.vmem [resolvable:$true] %s21
      %27 = dma.hbm_to_vmem [thread:$0]  %s20, 128, %s22, [#allocation4], 16, 16, 1
    $region5: #{tpu_custom_call.1} parent=1 // pred_fallthru
      _
    // Predicated region
    $region6: #{tpu_custom_call.1} parent=1 // pred_check
      _
    $region7: #{tpu_custom_call.1} parent=1 // pred_check_branch
      %29 = sbr.rel (0) target = $region9
    $region8: #{tpu_custom_call.1} parent=1 // pred_region
      %31 = vsyncadd [#allocation7], 0
      %s32 = sshll.u32 %s1, 4
      %s33 = int_to_ptr.hbm [resolvable:$true] %s32
      %s34 = sshll.u32 [#allocation6], 4
      %s35 = int_to_ptr.vmem [resolvable:$true] %s34
      %40 = dma.hbm_to_vmem [thread:$0]  %s33, 512, %s35, [#allocation7], 256, 256, 16
    $region9: #{tpu_custom_call.1} parent=1 // pred_fallthru
      _
    // Predicated region
    $region10: #{tpu_custom_call.1} parent=1 // pred_check
      _
    $region11: #{tpu_custom_call.1} parent=1 // pred_check_branch
      %42 = sbr.rel (0) target = $region13
    $region12: #{tpu_custom_call.1} parent=1 // pred_region
      %44 = vsyncadd [#allocation7], 0
      %s45 = sshll.u32 %s2, 4
      %s46 = int_to_ptr.hbm [resolvable:$true] %s45
      %s47 = sshll.u32 [#allocation8], 4
      %s48 = int_to_ptr.vmem [resolvable:$true] %s47
      %53 = dma.hbm_to_vmem [thread:$0]  %s46, 4096, %s48, [#allocation7], 256, 256, 16
    $region13: #{tpu_custom_call.1} parent=1 // pred_fallthru
      _
    // Predicated region
    $region14: #{tpu_custom_call.1} parent=1 // pred_check
      _
    $region15: #{tpu_custom_call.1} parent=1 // pred_check_branch
      %55 = sbr.rel (0) target = $region17
    $region16: #{tpu_custom_call.1} parent=1 // pred_region
      %57 = vsyncadd [#allocation10], 0
      %s59 = sshll.u32 %s3, 4
      %s60 = int_to_ptr.hbm [resolvable:$true] %s59
      %s61 = sshll.u32 [#allocation9], 4
      %s62 = int_to_ptr.vmem [resolvable:$true] %s61
      %64 = dma.hbm_to_vmem [thread:$0]  %s60, 64, %s62, [#allocation10]
    $region17: #{tpu_custom_call.1} parent=1 // pred_fallthru
      _
    // Predicated region
    $region18: #{tpu_custom_call.1} parent=1 // pred_check
      _
    $region19: #{tpu_custom_call.1} parent=1 // pred_check_branch
      %66 = sbr.rel (0) target = $region21
    $region20: #{tpu_custom_call.1} parent=1 // pred_region
      %68 = vsyncadd [#allocation10], 0
      %s69 = sshll.u32 %s4, 4
      %s70 = int_to_ptr.hbm [resolvable:$true] %s69
      %s71 = sshll.u32 [#allocation11], 4
      %s72 = int_to_ptr.vmem [resolvable:$true] %s71
      %77 = dma.hbm_to_vmem [thread:$0]  %s70, 1024, %s72, [#allocation10], 64, 64, 4
    $region21: #{tpu_custom_call.1} parent=1 // pred_fallthru
      _
    // Predicated region
    $region22: #{tpu_custom_call.1} parent=1 // pred_check
      _
    $region23: #{tpu_custom_call.1} parent=1 // pred_check_branch
      %79 = sbr.rel (0) target = $region25
    $region24: #{tpu_custom_call.1} parent=1 // pred_region
      _
    $region25: #{tpu_custom_call.1} parent=1 // pred_fallthru
      _
    // Predicated region
    $region26: #{tpu_custom_call.1} parent=1 // pred_check
      _
    $region27: #{tpu_custom_call.1} parent=1 // pred_check_branch
      %81 = sbr.rel (0) target = $region29
    $region28: #{tpu_custom_call.1} parent=1 // pred_region
      %83 = dma.done [#allocation4], 128
    $region29: #{tpu_custom_call.1} parent=1 // pred_fallthru
      _
    // Predicated region
    $region30: #{tpu_custom_call.1} parent=1 // pred_check
      _
    $region31: #{tpu_custom_call.1} parent=1 // pred_check_branch
      %85 = sbr.rel (0) target = $region33
    $region32: #{tpu_custom_call.1} parent=1 // pred_region
      %87 = dma.done [#allocation7], 512
    $region33: #{tpu_custom_call.1} parent=1 // pred_fallthru
      _
    // Predicated region
    $region34: #{tpu_custom_call.1} parent=1 // pred_check
      _
    $region35: #{tpu_custom_call.1} parent=1 // pred_check_branch
      %89 = sbr.rel (0) target = $region37
    $region36: #{tpu_custom_call.1} parent=1 // pred_region
      %91 = dma.done [#allocation7], 4096
    $region37: #{tpu_custom_call.1} parent=1 // pred_fallthru
      _
    // Predicated region
    $region38: #{tpu_custom_call.1} parent=1 // pred_check
      _
    $region39: #{tpu_custom_call.1} parent=1 // pred_check_branch
      %93 = sbr.rel (0) target = $region41
    $region40: #{tpu_custom_call.1} parent=1 // pred_region
      %95 = dma.done [#allocation10], 64
    $region41: #{tpu_custom_call.1} parent=1 // pred_fallthru
      _
    // Predicated region
    $region42: #{tpu_custom_call.1} parent=1 // pred_check
      _
    $region43: #{tpu_custom_call.1} parent=1 // pred_check_branch
      %97 = sbr.rel (0) target = $region45
    $region44: #{tpu_custom_call.1} parent=1 // pred_region
      %99 = dma.done [#allocation10], 1024
    $region45: #{tpu_custom_call.1} parent=1 // pred_fallthru
      _
    %v101 = vld [vmem:[#allocation6] sm:$0xff]
    %v102 = vld [vmem:[#allocation6 + $0x8] sm:$0xff]
    %v103 = vld [vmem:[#allocation6 + $0x10] sm:$0xff]
    %v104 = vld [vmem:[#allocation6 + $0x18] sm:$0xff]
    %v105 = vld [vmem:[#allocation3] sm:$0x1]
    %v110 = vunpack.c.l.b16 %v101
    %v111 = vunpack.c.h.b16 %v101
    %v112 = vunpack.c.l.b16 %v102
    %v113 = vunpack.c.h.b16 %v102
    %v114 = vunpack.c.l.b16 %v103
    %v115 = vunpack.c.h.b16 %v103
    %v116 = vunpack.c.l.b16 %v104
    %v117 = vunpack.c.h.b16 %v104
    %v118 = vpack.c.b16 %v114, %v110
    %v119 = vpack.c.b16 %v115, %v111
    %v120 = vpack.c.b16 %v116, %v112
    %v121 = vpack.c.b16 %v117, %v113
    %vm126 = vcmask 130048
    %v128 = vsel %vm126, %v105, 0
    %130 = vmatpush.bf16.msra.mxu0 0
    %131 = vmatpush.bf16.msra.mxu0 0
    %132 = vmatpush.bf16.msra.mxu0 0
    %133 = vmatpush.bf16.msra.mxu0 0
    %134 = vmatpush.bf16.msra.mxu0 0
    %135 = vmatpush.bf16.msra.mxu0 0
    %136 = vmatpush.bf16.msra.mxu0 0
    %137 = vmatpush.bf16.msra.mxu0 %v118
    %138 = vmatmul.bf16.gmra.mxu0 %v128
    %v139 = vpop.f32.mrf.mxu0
    %v140 = vadd.f32 0.0, %v139
    %v141 = vpop.f32.mrf.mxu0
    %142 = vdwg.mxu0
    %143 = vmatpush.bf16.msra.mxu0 0
    %144 = vmatpush.bf16.msra.mxu0 0
    %145 = vmatpush.bf16.msra.mxu0 0
    %146 = vmatpush.bf16.msra.mxu0 0
    %147 = vmatpush.bf16.msra.mxu0 0
    %148 = vmatpush.bf16.msra.mxu0 0
    %149 = vmatpush.bf16.msra.mxu0 0
    %150 = vmatpush.bf16.msra.mxu0 %v119
    %151 = vmatmul.bf16.gmra.mxu0 %v128
    %v152 = vpop.f32.mrf.mxu0
    %v153 = vadd.f32 0.0, %v152
    %v154 = vpop.f32.mrf.mxu0
    %155 = vdwg.mxu0
    %156 = vmatpush.bf16.msra.mxu0 0
    %157 = vmatpush.bf16.msra.mxu0 0
    %158 = vmatpush.bf16.msra.mxu0 0
    %159 = vmatpush.bf16.msra.mxu0 0
    %160 = vmatpush.bf16.msra.mxu0 0
    %161 = vmatpush.bf16.msra.mxu0 0
    %162 = vmatpush.bf16.msra.mxu0 0
    %163 = vmatpush.bf16.msra.mxu0 %v120
    %164 = vmatmul.bf16.gmra.mxu0 %v128
    %v165 = vpop.f32.mrf.mxu0
    %v166 = vadd.f32 0.0, %v165
    %v167 = vpop.f32.mrf.mxu0
    %168 = vdwg.mxu0
    %169 = vmatpush.bf16.msra.mxu0 0
    %170 = vmatpush.bf16.msra.mxu0 0
    %171 = vmatpush.bf16.msra.mxu0 0
    %172 = vmatpush.bf16.msra.mxu0 0
    %173 = vmatpush.bf16.msra.mxu0 0
    %174 = vmatpush.bf16.msra.mxu0 0
    %175 = vmatpush.bf16.msra.mxu0 0
    %176 = vmatpush.bf16.msra.mxu0 %v121
    %177 = vmatmul.bf16.gmra.mxu0 %v128
    %v178 = vpop.f32.mrf.mxu0
    %v179 = vadd.f32 0.0, %v178
    %v180 = vpop.f32.mrf.mxu0
    %181 = vdwg.mxu0
    %v182 = vpack.c.bf16 %v153, %v140
    %v183 = vpack.c.bf16 %v179, %v166
    %v186 = vrot.slane %v182, 3
    %v187 = vrot.slane %v183, 6
    %v188 = vrot.slane %v183, 1
    %vm189 = vcmask 1040384
    %v192 = vsel %vm189, %v182, %v186
    %vm193 = vcmask 1042434
    %v196 = vsel %vm193, %v187, %v188
    %vm197 = vcmask 1041408
    %v198 = vsel %vm197, %v192, %v196
    %200 = vst [vmem:[#allocation2] sm:$0xf] %v198
    %s201 = scalar_lea.vmem [#allocation3], 1
    %v202 = vld [vmem:[%s201] sm:$0x1]
    %v204 = vsel %vm126, %v202, 0
    %206 = vmatpush.bf16.msra.mxu0 0
    %207 = vmatpush.bf16.msra.mxu0 0
    %208 = vmatpush.bf16.msra.mxu0 0
    %209 = vmatpush.bf16.msra.mxu0 0
    %210 = vmatpush.bf16.msra.mxu0 0
    %211 = vmatpush.bf16.msra.mxu0 0
    %212 = vmatpush.bf16.msra.mxu0 0
    %213 = vmatpush.bf16.msra.mxu0 %v118
    %214 = vmatmul.bf16.gmra.mxu0 %v204
    %v215 = vpop.f32.mrf.mxu0
    %v216 = vadd.f32 0.0, %v215
    %v217 = vpop.f32.mrf.mxu0
    %218 = vdwg.mxu0
    %219 = vmatpush.bf16.msra.mxu0 0
    %220 = vmatpush.bf16.msra.mxu0 0
    %221 = vmatpush.bf16.msra.mxu0 0
    %222 = vmatpush.bf16.msra.mxu0 0
    %223 = vmatpush.bf16.msra.mxu0 0
    %224 = vmatpush.bf16.msra.mxu0 0
    %225 = vmatpush.bf16.msra.mxu0 0
    %226 = vmatpush.bf16.msra.mxu0 %v119
    %227 = vmatmul.bf16.gmra.mxu0 %v204
    %v228 = vpop.f32.mrf.mxu0
    %v229 = vadd.f32 0.0, %v228
    %v230 = vpop.f32.mrf.mxu0
    %231 = vdwg.mxu0
    %232 = vmatpush.bf16.msra.mxu0 0
    %233 = vmatpush.bf16.msra.mxu0 0
    %234 = vmatpush.bf16.msra.mxu0 0
    %235 = vmatpush.bf16.msra.mxu0 0
    %236 = vmatpush.bf16.msra.mxu0 0
    %237 = vmatpush.bf16.msra.mxu0 0
    %238 = vmatpush.bf16.msra.mxu0 0
    %239 = vmatpush.bf16.msra.mxu0 %v120
    %240 = vmatmul.bf16.gmra.mxu0 %v204
    %v241 = vpop.f32.mrf.mxu0
    %v242 = vadd.f32 0.0, %v241
    %v243 = vpop.f32.mrf.mxu0
    %244 = vdwg.mxu0
    %245 = vmatpush.bf16.msra.mxu0 0
    %246 = vmatpush.bf16.msra.mxu0 0
    %247 = vmatpush.bf16.msra.mxu0 0
    %248 = vmatpush.bf16.msra.mxu0 0
    %249 = vmatpush.bf16.msra.mxu0 0
    %250 = vmatpush.bf16.msra.mxu0 0
    %251 = vmatpush.bf16.msra.mxu0 0
    %252 = vmatpush.bf16.msra.mxu0 %v121
    %253 = vmatmul.bf16.gmra.mxu0 %v204
    %v254 = vpop.f32.mrf.mxu0
    %v255 = vadd.f32 0.0, %v254
    %v256 = vpop.f32.mrf.mxu0
    %257 = vdwg.mxu0
    %v258 = vpack.c.bf16 %v229, %v216
    %v259 = vpack.c.bf16 %v255, %v242
    %v262 = vrot.slane %v258, 3
    %v263 = vrot.slane %v259, 6
    %v264 = vrot.slane %v259, 1
    %v267 = vsel %vm189, %v258, %v262
    %v270 = vsel %vm193, %v263, %v264
    %v271 = vsel %vm197, %v267, %v270
    %s273 = scalar_lea.vmem [#allocation2], 4
    %274 = vst [vmem:[%s273] sm:$0xf] %v271
    %s275 = scalar_lea.vmem [#allocation3], 2
    %v276 = vld [vmem:[%s275] sm:$0x1]
    %v278 = vsel %vm126, %v276, 0
    %280 = vmatpush.bf16.msra.mxu0 0
    %281 = vmatpush.bf16.msra.mxu0 0
    %282 = vmatpush.bf16.msra.mxu0 0
    %283 = vmatpush.bf16.msra.mxu0 0
    %284 = vmatpush.bf16.msra.mxu0 0
    %285 = vmatpush.bf16.msra.mxu0 0
    %286 = vmatpush.bf16.msra.mxu0 0
    %287 = vmatpush.bf16.msra.mxu0 %v118
    %288 = vmatmul.bf16.gmra.mxu0 %v278
    %v289 = vpop.f32.mrf.mxu0
    %v290 = vadd.f32 0.0, %v289
    %v291 = vpop.f32.mrf.mxu0
    %292 = vdwg.mxu0
    %293 = vmatpush.bf16.msra.mxu0 0
    %294 = vmatpush.bf16.msra.mxu0 0
    %295 = vmatpush.bf16.msra.mxu0 0
    %296 = vmatpush.bf16.msra.mxu0 0
    %297 = vmatpush.bf16.msra.mxu0 0
    %298 = vmatpush.bf16.msra.mxu0 0
    %299 = vmatpush.bf16.msra.mxu0 0
    %300 = vmatpush.bf16.msra.mxu0 %v119
    %301 = vmatmul.bf16.gmra.mxu0 %v278
    %v302 = vpop.f32.mrf.mxu0
    %v303 = vadd.f32 0.0, %v302
    %v304 = vpop.f32.mrf.mxu0
    %305 = vdwg.mxu0
    %306 = vmatpush.bf16.msra.mxu0 0
    %307 = vmatpush.bf16.msra.mxu0 0
    %308 = vmatpush.bf16.msra.mxu0 0
    %309 = vmatpush.bf16.msra.mxu0 0
    %310 = vmatpush.bf16.msra.mxu0 0
    %311 = vmatpush.bf16.msra.mxu0 0
    %312 = vmatpush.bf16.msra.mxu0 0
    %313 = vmatpush.bf16.msra.mxu0 %v120
    %314 = vmatmul.bf16.gmra.mxu0 %v278
    %v315 = vpop.f32.mrf.mxu0
    %v316 = vadd.f32 0.0, %v315
    %v317 = vpop.f32.mrf.mxu0
    %318 = vdwg.mxu0
    %319 = vmatpush.bf16.msra.mxu0 0
    %320 = vmatpush.bf16.msra.mxu0 0
    %321 = vmatpush.bf16.msra.mxu0 0
    %322 = vmatpush.bf16.msra.mxu0 0
    %323 = vmatpush.bf16.msra.mxu0 0
    %324 = vmatpush.bf16.msra.mxu0 0
    %325 = vmatpush.bf16.msra.mxu0 0
    %326 = vmatpush.bf16.msra.mxu0 %v121
    %327 = vmatmul.bf16.gmra.mxu0 %v278
    %v328 = vpop.f32.mrf.mxu0
    %v329 = vadd.f32 0.0, %v328
    %v330 = vpop.f32.mrf.mxu0
    %331 = vdwg.mxu0
    %v332 = vpack.c.bf16 %v303, %v290
    %v333 = vpack.c.bf16 %v329, %v316
    %v336 = vrot.slane %v332, 3
    %v337 = vrot.slane %v333, 6
    %v338 = vrot.slane %v333, 1
    %v341 = vsel %vm189, %v332, %v336
    %v344 = vsel %vm193, %v337, %v338
    %v345 = vsel %vm197, %v341, %v344
    %s347 = scalar_lea.vmem [#allocation2], 8
    %348 = vst [vmem:[%s347] sm:$0xf] %v345
    %s349 = scalar_lea.vmem [#allocation3], 3
    %v350 = vld [vmem:[%s349] sm:$0x1]
    %v352 = vsel %vm126, %v350, 0
    %354 = vmatpush.bf16.msra.mxu0 0
    %355 = vmatpush.bf16.msra.mxu0 0
    %356 = vmatpush.bf16.msra.mxu0 0
    %357 = vmatpush.bf16.msra.mxu0 0
    %358 = vmatpush.bf16.msra.mxu0 0
    %359 = vmatpush.bf16.msra.mxu0 0
    %360 = vmatpush.bf16.msra.mxu0 0
    %361 = vmatpush.bf16.msra.mxu0 %v118
    %362 = vmatmul.bf16.gmra.mxu0 %v352
    %v363 = vpop.f32.mrf.mxu0
    %v364 = vadd.f32 0.0, %v363
    %v365 = vpop.f32.mrf.mxu0
    %366 = vdwg.mxu0
    %367 = vmatpush.bf16.msra.mxu0 0
    %368 = vmatpush.bf16.msra.mxu0 0
    %369 = vmatpush.bf16.msra.mxu0 0
    %370 = vmatpush.bf16.msra.mxu0 0
    %371 = vmatpush.bf16.msra.mxu0 0
    %372 = vmatpush.bf16.msra.mxu0 0
    %373 = vmatpush.bf16.msra.mxu0 0
    %374 = vmatpush.bf16.msra.mxu0 %v119
    %375 = vmatmul.bf16.gmra.mxu0 %v352
    %v376 = vpop.f32.mrf.mxu0
    %v377 = vadd.f32 0.0, %v376
    %v378 = vpop.f32.mrf.mxu0
    %379 = vdwg.mxu0
    %380 = vmatpush.bf16.msra.mxu0 0
    %381 = vmatpush.bf16.msra.mxu0 0
    %382 = vmatpush.bf16.msra.mxu0 0
    %383 = vmatpush.bf16.msra.mxu0 0
    %384 = vmatpush.bf16.msra.mxu0 0
    %385 = vmatpush.bf16.msra.mxu0 0
    %386 = vmatpush.bf16.msra.mxu0 0
    %387 = vmatpush.bf16.msra.mxu0 %v120
    %388 = vmatmul.bf16.gmra.mxu0 %v352
    %v389 = vpop.f32.mrf.mxu0
    %v390 = vadd.f32 0.0, %v389
    %v391 = vpop.f32.mrf.mxu0
    %392 = vdwg.mxu0
    %393 = vmatpush.bf16.msra.mxu0 0
    %394 = vmatpush.bf16.msra.mxu0 0
    %395 = vmatpush.bf16.msra.mxu0 0
    %396 = vmatpush.bf16.msra.mxu0 0
    %397 = vmatpush.bf16.msra.mxu0 0
    %398 = vmatpush.bf16.msra.mxu0 0
    %399 = vmatpush.bf16.msra.mxu0 0
    %400 = vmatpush.bf16.msra.mxu0 %v121
    %401 = vmatmul.bf16.gmra.mxu0 %v352
    %v402 = vpop.f32.mrf.mxu0
    %v403 = vadd.f32 0.0, %v402
    %v404 = vpop.f32.mrf.mxu0
    %405 = vdwg.mxu0
    %v406 = vpack.c.bf16 %v377, %v364
    %v407 = vpack.c.bf16 %v403, %v390
    %v410 = vrot.slane %v406, 3
    %v411 = vrot.slane %v407, 6
    %v412 = vrot.slane %v407, 1
    %v415 = vsel %vm189, %v406, %v410
    %v418 = vsel %vm193, %v411, %v412
    %v419 = vsel %vm197, %v415, %v418
    %s421 = scalar_lea.vmem [#allocation2], 12
    %422 = vst [vmem:[%s421] sm:$0xf] %v419
    %s423 = scalar_lea.vmem [#allocation3], 4
    %v424 = vld [vmem:[%s423] sm:$0x1]
    %v426 = vsel %vm126, %v424, 0
    %428 = vmatpush.bf16.msra.mxu0 0
    %429 = vmatpush.bf16.msra.mxu0 0
    %430 = vmatpush.bf16.msra.mxu0 0
    %431 = vmatpush.bf16.msra.mxu0 0
    %432 = vmatpush.bf16.msra.mxu0 0
    %433 = vmatpush.bf16.msra.mxu0 0
    %434 = vmatpush.bf16.msra.mxu0 0
    %435 = vmatpush.bf16.msra.mxu0 %v118
    %436 = vmatmul.bf16.gmra.mxu0 %v426
    %v437 = vpop.f32.mrf.mxu0
    %v438 = vadd.f32 0.0, %v437
    %v439 = vpop.f32.mrf.mxu0
    %440 = vdwg.mxu0
    %441 = vmatpush.bf16.msra.mxu0 0
    %442 = vmatpush.bf16.msra.mxu0 0
    %443 = vmatpush.bf16.msra.mxu0 0
    %444 = vmatpush.bf16.msra.mxu0 0
    %445 = vmatpush.bf16.msra.mxu0 0
    %446 = vmatpush.bf16.msra.mxu0 0
    %447 = vmatpush.bf16.msra.mxu0 0
    %448 = vmatpush.bf16.msra.mxu0 %v119
    %449 = vmatmul.bf16.gmra.mxu0 %v426
    %v450 = vpop.f32.mrf.mxu0
    %v451 = vadd.f32 0.0, %v450
    %v452 = vpop.f32.mrf.mxu0
    %453 = vdwg.mxu0
    %454 = vmatpush.bf16.msra.mxu0 0
    %455 = vmatpush.bf16.msra.mxu0 0
    %456 = vmatpush.bf16.msra.mxu0 0
    %457 = vmatpush.bf16.msra.mxu0 0
    %458 = vmatpush.bf16.msra.mxu0 0
    %459 = vmatpush.bf16.msra.mxu0 0
    %460 = vmatpush.bf16.msra.mxu0 0
    %461 = vmatpush.bf16.msra.mxu0 %v120
    %462 = vmatmul.bf16.gmra.mxu0 %v426
    %v463 = vpop.f32.mrf.mxu0
    %v464 = vadd.f32 0.0, %v463
    %v465 = vpop.f32.mrf.mxu0
    %466 = vdwg.mxu0
    %467 = vmatpush.bf16.msra.mxu0 0
    %468 = vmatpush.bf16.msra.mxu0 0
    %469 = vmatpush.bf16.msra.mxu0 0
    %470 = vmatpush.bf16.msra.mxu0 0
    %471 = vmatpush.bf16.msra.mxu0 0
    %472 = vmatpush.bf16.msra.mxu0 0
    %473 = vmatpush.bf16.msra.mxu0 0
    %474 = vmatpush.bf16.msra.mxu0 %v121
    %475 = vmatmul.bf16.gmra.mxu0 %v426
    %v476 = vpop.f32.mrf.mxu0
    %v477 = vadd.f32 0.0, %v476
    %v478 = vpop.f32.mrf.mxu0
    %479 = vdwg.mxu0
    %v480 = vpack.c.bf16 %v451, %v438
    %v481 = vpack.c.bf16 %v477, %v464
    %v484 = vrot.slane %v480, 3
    %v485 = vrot.slane %v481, 6
    %v486 = vrot.slane %v481, 1
    %v489 = vsel %vm189, %v480, %v484
    %v492 = vsel %vm193, %v485, %v486
    %v493 = vsel %vm197, %v489, %v492
    %s495 = scalar_lea.vmem [#allocation2], 16
    %496 = vst [vmem:[%s495] sm:$0xf] %v493
    %s497 = scalar_lea.vmem [#allocation3], 5
    %v498 = vld [vmem:[%s497] sm:$0x1]
    %v500 = vsel %vm126, %v498, 0
    %502 = vmatpush.bf16.msra.mxu0 0
    %503 = vmatpush.bf16.msra.mxu0 0
    %504 = vmatpush.bf16.msra.mxu0 0
    %505 = vmatpush.bf16.msra.mxu0 0
    %506 = vmatpush.bf16.msra.mxu0 0
    %507 = vmatpush.bf16.msra.mxu0 0
    %508 = vmatpush.bf16.msra.mxu0 0
    %509 = vmatpush.bf16.msra.mxu0 %v118
    %510 = vmatmul.bf16.gmra.mxu0 %v500
    %v511 = vpop.f32.mrf.mxu0
    %v512 = vadd.f32 0.0, %v511
    %v513 = vpop.f32.mrf.mxu0
    %514 = vdwg.mxu0
    %515 = vmatpush.bf16.msra.mxu0 0
    %516 = vmatpush.bf16.msra.mxu0 0
    %517 = vmatpush.bf16.msra.mxu0 0
    %518 = vmatpush.bf16.msra.mxu0 0
    %519 = vmatpush.bf16.msra.mxu0 0
    %520 = vmatpush.bf16.msra.mxu0 0
    %521 = vmatpush.bf16.msra.mxu0 0
    %522 = vmatpush.bf16.msra.mxu0 %v119
    %523 = vmatmul.bf16.gmra.mxu0 %v500
    %v524 = vpop.f32.mrf.mxu0
    %v525 = vadd.f32 0.0, %v524
    %v526 = vpop.f32.mrf.mxu0
    %527 = vdwg.mxu0
    %528 = vmatpush.bf16.msra.mxu0 0
    %529 = vmatpush.bf16.msra.mxu0 0
    %530 = vmatpush.bf16.msra.mxu0 0
    %531 = vmatpush.bf16.msra.mxu0 0
    %532 = vmatpush.bf16.msra.mxu0 0
    %533 = vmatpush.bf16.msra.mxu0 0
    %534 = vmatpush.bf16.msra.mxu0 0
    %535 = vmatpush.bf16.msra.mxu0 %v120
    %536 = vmatmul.bf16.gmra.mxu0 %v500
    %v537 = vpop.f32.mrf.mxu0
    %v538 = vadd.f32 0.0, %v537
    %v539 = vpop.f32.mrf.mxu0
    %540 = vdwg.mxu0
    %541 = vmatpush.bf16.msra.mxu0 0
    %542 = vmatpush.bf16.msra.mxu0 0
    %543 = vmatpush.bf16.msra.mxu0 0
    %544 = vmatpush.bf16.msra.mxu0 0
    %545 = vmatpush.bf16.msra.mxu0 0
    %546 = vmatpush.bf16.msra.mxu0 0
    %547 = vmatpush.bf16.msra.mxu0 0
    %548 = vmatpush.bf16.msra.mxu0 %v121
    %549 = vmatmul.bf16.gmra.mxu0 %v500
    %v550 = vpop.f32.mrf.mxu0
    %v551 = vadd.f32 0.0, %v550
    %v552 = vpop.f32.mrf.mxu0
    %553 = vdwg.mxu0
    %v554 = vpack.c.bf16 %v525, %v512
    %v555 = vpack.c.bf16 %v551, %v538
    %v558 = vrot.slane %v554, 3
    %v559 = vrot.slane %v555, 6
    %v560 = vrot.slane %v555, 1
    %v563 = vsel %vm189, %v554, %v558
    %v566 = vsel %vm193, %v559, %v560
    %v567 = vsel %vm197, %v563, %v566
    %s569 = scalar_lea.vmem [#allocation2], 20
    %570 = vst [vmem:[%s569] sm:$0xf] %v567
    %s571 = scalar_lea.vmem [#allocation3], 6
    %v572 = vld [vmem:[%s571] sm:$0x1]
    %v574 = vsel %vm126, %v572, 0
    %576 = vmatpush.bf16.msra.mxu0 0
    %577 = vmatpush.bf16.msra.mxu0 0
    %578 = vmatpush.bf16.msra.mxu0 0
    %579 = vmatpush.bf16.msra.mxu0 0
    %580 = vmatpush.bf16.msra.mxu0 0
    %581 = vmatpush.bf16.msra.mxu0 0
    %582 = vmatpush.bf16.msra.mxu0 0
    %583 = vmatpush.bf16.msra.mxu0 %v118
    %584 = vmatmul.bf16.gmra.mxu0 %v574
    %v585 = vpop.f32.mrf.mxu0
    %v586 = vadd.f32 0.0, %v585
    %v587 = vpop.f32.mrf.mxu0
    %588 = vdwg.mxu0
    %589 = vmatpush.bf16.msra.mxu0 0
    %590 = vmatpush.bf16.msra.mxu0 0
    %591 = vmatpush.bf16.msra.mxu0 0
    %592 = vmatpush.bf16.msra.mxu0 0
    %593 = vmatpush.bf16.msra.mxu0 0
    %594 = vmatpush.bf16.msra.mxu0 0
    %595 = vmatpush.bf16.msra.mxu0 0
    %596 = vmatpush.bf16.msra.mxu0 %v119
    %597 = vmatmul.bf16.gmra.mxu0 %v574
    %v598 = vpop.f32.mrf.mxu0
    %v599 = vadd.f32 0.0, %v598
    %v600 = vpop.f32.mrf.mxu0
    %601 = vdwg.mxu0
    %602 = vmatpush.bf16.msra.mxu0 0
    %603 = vmatpush.bf16.msra.mxu0 0
    %604 = vmatpush.bf16.msra.mxu0 0
    %605 = vmatpush.bf16.msra.mxu0 0
    %606 = vmatpush.bf16.msra.mxu0 0
    %607 = vmatpush.bf16.msra.mxu0 0
    %608 = vmatpush.bf16.msra.mxu0 0
    %609 = vmatpush.bf16.msra.mxu0 %v120
    %610 = vmatmul.bf16.gmra.mxu0 %v574
    %v611 = vpop.f32.mrf.mxu0
    %v612 = vadd.f32 0.0, %v611
    %v613 = vpop.f32.mrf.mxu0
    %614 = vdwg.mxu0
    %615 = vmatpush.bf16.msra.mxu0 0
    %616 = vmatpush.bf16.msra.mxu0 0
    %617 = vmatpush.bf16.msra.mxu0 0
    %618 = vmatpush.bf16.msra.mxu0 0
    %619 = vmatpush.bf16.msra.mxu0 0
    %620 = vmatpush.bf16.msra.mxu0 0
    %621 = vmatpush.bf16.msra.mxu0 0
    %622 = vmatpush.bf16.msra.mxu0 %v121
    %623 = vmatmul.bf16.gmra.mxu0 %v574
    %v624 = vpop.f32.mrf.mxu0
    %v625 = vadd.f32 0.0, %v624
    %v626 = vpop.f32.mrf.mxu0
    %627 = vdwg.mxu0
    %v628 = vpack.c.bf16 %v599, %v586
    %v629 = vpack.c.bf16 %v625, %v612
    %v632 = vrot.slane %v628, 3
    %v633 = vrot.slane %v629, 6
    %v634 = vrot.slane %v629, 1
    %v637 = vsel %vm189, %v628, %v632
    %v640 = vsel %vm193, %v633, %v634
    %v641 = vsel %vm197, %v637, %v640
    %s643 = scalar_lea.vmem [#allocation2], 24
    %644 = vst [vmem:[%s643] sm:$0xf] %v641
    %s645 = scalar_lea.vmem [#allocation3], 7
    %v646 = vld [vmem:[%s645] sm:$0x1]
    %v648 = vsel %vm126, %v646, 0
    %650 = vmatpush.bf16.msra.mxu0 0
    %651 = vmatpush.bf16.msra.mxu0 0
    %652 = vmatpush.bf16.msra.mxu0 0
    %653 = vmatpush.bf16.msra.mxu0 0
    %654 = vmatpush.bf16.msra.mxu0 0
    %655 = vmatpush.bf16.msra.mxu0 0
    %656 = vmatpush.bf16.msra.mxu0 0
    %657 = vmatpush.bf16.msra.mxu0 %v118
    %658 = vmatmul.bf16.gmra.mxu0 %v648
    %v659 = vpop.f32.mrf.mxu0
    %v660 = vadd.f32 0.0, %v659
    %v661 = vpop.f32.mrf.mxu0
    %662 = vdwg.mxu0
    %663 = vmatpush.bf16.msra.mxu0 0
    %664 = vmatpush.bf16.msra.mxu0 0
    %665 = vmatpush.bf16.msra.mxu0 0
    %666 = vmatpush.bf16.msra.mxu0 0
    %667 = vmatpush.bf16.msra.mxu0 0
    %668 = vmatpush.bf16.msra.mxu0 0
    %669 = vmatpush.bf16.msra.mxu0 0
    %670 = vmatpush.bf16.msra.mxu0 %v119
    %671 = vmatmul.bf16.gmra.mxu0 %v648
    %v672 = vpop.f32.mrf.mxu0
    %v673 = vadd.f32 0.0, %v672
    %v674 = vpop.f32.mrf.mxu0
    %675 = vdwg.mxu0
    %676 = vmatpush.bf16.msra.mxu0 0
    %677 = vmatpush.bf16.msra.mxu0 0
    %678 = vmatpush.bf16.msra.mxu0 0
    %679 = vmatpush.bf16.msra.mxu0 0
    %680 = vmatpush.bf16.msra.mxu0 0
    %681 = vmatpush.bf16.msra.mxu0 0
    %682 = vmatpush.bf16.msra.mxu0 0
    %683 = vmatpush.bf16.msra.mxu0 %v120
    %684 = vmatmul.bf16.gmra.mxu0 %v648
    %v685 = vpop.f32.mrf.mxu0
    %v686 = vadd.f32 0.0, %v685
    %v687 = vpop.f32.mrf.mxu0
    %688 = vdwg.mxu0
    %689 = vmatpush.bf16.msra.mxu0 0
    %690 = vmatpush.bf16.msra.mxu0 0
    %691 = vmatpush.bf16.msra.mxu0 0
    %692 = vmatpush.bf16.msra.mxu0 0
    %693 = vmatpush.bf16.msra.mxu0 0
    %694 = vmatpush.bf16.msra.mxu0 0
    %695 = vmatpush.bf16.msra.mxu0 0
    %696 = vmatpush.bf16.msra.mxu0 %v121
    %697 = vmatmul.bf16.gmra.mxu0 %v648
    %v698 = vpop.f32.mrf.mxu0
    %v699 = vadd.f32 0.0, %v698
    %v700 = vpop.f32.mrf.mxu0
    %701 = vdwg.mxu0
    %v702 = vpack.c.bf16 %v673, %v660
    %v703 = vpack.c.bf16 %v699, %v686
    %v706 = vrot.slane %v702, 3
    %v707 = vrot.slane %v703, 6
    %v708 = vrot.slane %v703, 1
    %v711 = vsel %vm189, %v702, %v706
    %v714 = vsel %vm193, %v707, %v708
    %v715 = vsel %vm197, %v711, %v714
    %s717 = scalar_lea.vmem [#allocation2], 28
    %718 = vst [vmem:[%s717] sm:$0xf] %v715
    %v719 = vld [vmem:[#allocation9] sm:$0xf]
    %v721 = vperm.slane %v719, 0
    %v722 = vperm.slane %v719, 1
    %v723 = vperm.slane %v719, 2
    %v724 = vperm.slane %v719, 3
    %v725 = vld [vmem:[#allocation2] sm:$0xf]
    %v726 = vunpack.c.l.bf16 %v725
    %v727 = vrot.slane %v722, 6
    %v728 = vrot.slane %v723, 4
    %v729 = vrot.slane %v724, 2
    %v730 = vsel %vm197, %v721, %v727
    %vm731 = vcmask 1045508
    %v732 = vsel %vm731, %v728, %v729
    %vm733 = vcmask 1043456
    %v734 = vsel %vm733, %v730, %v732
    %v736 = vadd.f32 %v726, %v734
    %v737 = vld [vmem:[#allocation8] sm:$0xff]
    %v738 = vld [vmem:[#allocation8 + $0x8] sm:$0xff]
    %v739 = vld [vmem:[#allocation8 + $0x10] sm:$0xff]
    %v740 = vld [vmem:[#allocation8 + $0x18] sm:$0xff]
    %v741 = vld [vmem:[#allocation8 + $0x20] sm:$0xff]
    %v742 = vld [vmem:[#allocation8 + $0x28] sm:$0xff]
    %v743 = vld [vmem:[#allocation8 + $0x30] sm:$0xff]
    %v744 = vld [vmem:[#allocation8 + $0x38] sm:$0xff]
    %v745 = vld [vmem:[#allocation8 + $0x40] sm:$0xff]
    %v746 = vld [vmem:[#allocation8 + $0x48] sm:$0xff]
    %v747 = vld [vmem:[#allocation8 + $0x50] sm:$0xff]
    %v748 = vld [vmem:[#allocation8 + $0x58] sm:$0xff]
    %v749 = vld [vmem:[#allocation8 + $0x60] sm:$0xff]
    %v750 = vld [vmem:[#allocation8 + $0x68] sm:$0xff]
    %v751 = vld [vmem:[#allocation8 + $0x70] sm:$0xff]
    %v752 = vld [vmem:[#allocation8 + $0x78] sm:$0xff]
    %v753 = vld [vmem:[#allocation8 + $0x80] sm:$0xff]
    %v754 = vld [vmem:[#allocation8 + $0x88] sm:$0xff]
    %v755 = vld [vmem:[#allocation8 + $0x90] sm:$0xff]
    %v756 = vld [vmem:[#allocation8 + $0x98] sm:$0xff]
    %v757 = vld [vmem:[#allocation8 + $0xa0] sm:$0xff]
    %v758 = vld [vmem:[#allocation8 + $0xa8] sm:$0xff]
    %v759 = vld [vmem:[#allocation8 + $0xb0] sm:$0xff]
    %v760 = vld [vmem:[#allocation8 + $0xb8] sm:$0xff]
    %v761 = vld [vmem:[#allocation8 + $0xc0] sm:$0xff]
    %v762 = vld [vmem:[#allocation8 + $0xc8] sm:$0xff]
    %v763 = vld [vmem:[#allocation8 + $0xd0] sm:$0xff]
    %v764 = vld [vmem:[#allocation8 + $0xd8] sm:$0xff]
    %v765 = vld [vmem:[#allocation8 + $0xe0] sm:$0xff]
    %v766 = vld [vmem:[#allocation8 + $0xe8] sm:$0xff]
    %v767 = vld [vmem:[#allocation8 + $0xf0] sm:$0xff]
    %v768 = vld [vmem:[#allocation8 + $0xf8] sm:$0xff]
    %v801 = vunpack.c.l.b16 %v737
    %v802 = vunpack.c.h.b16 %v737
    %v803 = vunpack.c.l.b16 %v738
    %v804 = vunpack.c.h.b16 %v738
    %v805 = vunpack.c.l.b16 %v739
    %v806 = vunpack.c.h.b16 %v739
    %v807 = vunpack.c.l.b16 %v740
    %v808 = vunpack.c.h.b16 %v740
    %v809 = vunpack.c.l.b16 %v741
    %v810 = vunpack.c.h.b16 %v741
    %v811 = vunpack.c.l.b16 %v742
    %v812 = vunpack.c.h.b16 %v742
    %v813 = vunpack.c.l.b16 %v743
    %v814 = vunpack.c.h.b16 %v743
    %v815 = vunpack.c.l.b16 %v744
    %v816 = vunpack.c.h.b16 %v744
    %v817 = vunpack.c.l.b16 %v745
    %v818 = vunpack.c.h.b16 %v745
    %v819 = vunpack.c.l.b16 %v746
    %v820 = vunpack.c.h.b16 %v746
    %v821 = vunpack.c.l.b16 %v747
    %v822 = vunpack.c.h.b16 %v747
    %v823 = vunpack.c.l.b16 %v748
    %v824 = vunpack.c.h.b16 %v748
    %v825 = vunpack.c.l.b16 %v749
    %v826 = vunpack.c.h.b16 %v749
    %v827 = vunpack.c.l.b16 %v750
    %v828 = vunpack.c.h.b16 %v750
    %v829 = vunpack.c.l.b16 %v751
    %v830 = vunpack.c.h.b16 %v751
    %v831 = vunpack.c.l.b16 %v752
    %v832 = vunpack.c.h.b16 %v752
    %v833 = vunpack.c.l.b16 %v753
    %v834 = vunpack.c.h.b16 %v753
    %v835 = vunpack.c.l.b16 %v754
    %v836 = vunpack.c.h.b16 %v754
    %v837 = vunpack.c.l.b16 %v755
    %v838 = vunpack.c.h.b16 %v755
    %v839 = vunpack.c.l.b16 %v756
    %v840 = vunpack.c.h.b16 %v756
    %v841 = vunpack.c.l.b16 %v757
    %v842 = vunpack.c.h.b16 %v757
    %v843 = vunpack.c.l.b16 %v758
    %v844 = vunpack.c.h.b16 %v758
    %v845 = vunpack.c.l.b16 %v759
    %v846 = vunpack.c.h.b16 %v759
    %v847 = vunpack.c.l.b16 %v760
    %v848 = vunpack.c.h.b16 %v760
    %v849 = vunpack.c.l.b16 %v761
    %v850 = vunpack.c.h.b16 %v761
    %v851 = vunpack.c.l.b16 %v762
    %v852 = vunpack.c.h.b16 %v762
    %v853 = vunpack.c.l.b16 %v763
    %v854 = vunpack.c.h.b16 %v763
    %v855 = vunpack.c.l.b16 %v764
    %v856 = vunpack.c.h.b16 %v764
    %v857 = vunpack.c.l.b16 %v765
    %v858 = vunpack.c.h.b16 %v765
    %v859 = vunpack.c.l.b16 %v766
    %v860 = vunpack.c.h.b16 %v766
    %v861 = vunpack.c.l.b16 %v767
    %v862 = vunpack.c.h.b16 %v767
    %v863 = vunpack.c.l.b16 %v768
    %v864 = vunpack.c.h.b16 %v768
    %v865 = vpack.c.b16 %v805, %v801
    %v866 = vpack.c.b16 %v806, %v802
    %v867 = vpack.c.b16 %v807, %v803
    %v868 = vpack.c.b16 %v808, %v804
    %v869 = vpack.c.b16 %v813, %v809
    %v870 = vpack.c.b16 %v814, %v810
    %v871 = vpack.c.b16 %v815, %v811
    %v872 = vpack.c.b16 %v816, %v812
    %v873 = vpack.c.b16 %v821, %v817
    %v874 = vpack.c.b16 %v822, %v818
    %v875 = vpack.c.b16 %v823, %v819
    %v876 = vpack.c.b16 %v824, %v820
    %v877 = vpack.c.b16 %v829, %v825
    %v878 = vpack.c.b16 %v830, %v826
    %v879 = vpack.c.b16 %v831, %v827
    %v880 = vpack.c.b16 %v832, %v828
    %v881 = vpack.c.b16 %v837, %v833
    %v882 = vpack.c.b16 %v838, %v834
    %v883 = vpack.c.b16 %v839, %v835
    %v884 = vpack.c.b16 %v840, %v836
    %v885 = vpack.c.b16 %v845, %v841
    %v886 = vpack.c.b16 %v846, %v842
    %v887 = vpack.c.b16 %v847, %v843
    %v888 = vpack.c.b16 %v848, %v844
    %v889 = vpack.c.b16 %v853, %v849
    %v890 = vpack.c.b16 %v854, %v850
    %v891 = vpack.c.b16 %v855, %v851
    %v892 = vpack.c.b16 %v856, %v852
    %v893 = vpack.c.b16 %v861, %v857
    %v894 = vpack.c.b16 %v862, %v858
    %v895 = vpack.c.b16 %v863, %v859
    %v896 = vpack.c.b16 %v864, %v860
    %929 = vmatpush.bf16.msra.mxu0 %v893
    %930 = vmatpush.bf16.msra.mxu0 %v889
    %931 = vmatpush.bf16.msra.mxu0 %v885
    %932 = vmatpush.bf16.msra.mxu0 %v881
    %933 = vmatpush.bf16.msra.mxu0 %v877
    %934 = vmatpush.bf16.msra.mxu0 %v873
    %935 = vmatpush.bf16.msra.mxu0 %v869
    %936 = vmatpush.bf16.msra.mxu0 %v865
    %937 = vmatmul.bf16.gmra.mxu0 0
    %v938 = vpop.f32.mrf.mxu0
    %v939 = vadd.f32 0.0, %v938
    %v940 = vpop.f32.mrf.mxu0
    %941 = vdwg.mxu0
    %942 = vmatpush.bf16.msra.mxu0 %v894
    %943 = vmatpush.bf16.msra.mxu0 %v890
    %944 = vmatpush.bf16.msra.mxu0 %v886
    %945 = vmatpush.bf16.msra.mxu0 %v882
    %946 = vmatpush.bf16.msra.mxu0 %v878
    %947 = vmatpush.bf16.msra.mxu0 %v874
    %948 = vmatpush.bf16.msra.mxu0 %v870
    %949 = vmatpush.bf16.msra.mxu0 %v866
    %950 = vmatmul.bf16.gmra.mxu0 0
    %v951 = vpop.f32.mrf.mxu0
    %v952 = vadd.f32 0.0, %v951
    %v953 = vpop.f32.mrf.mxu0
    %954 = vdwg.mxu0
    %955 = vmatpush.bf16.msra.mxu0 %v895
    %956 = vmatpush.bf16.msra.mxu0 %v891
    %957 = vmatpush.bf16.msra.mxu0 %v887
    %958 = vmatpush.bf16.msra.mxu0 %v883
    %959 = vmatpush.bf16.msra.mxu0 %v879
    %960 = vmatpush.bf16.msra.mxu0 %v875
    %961 = vmatpush.bf16.msra.mxu0 %v871
    %962 = vmatpush.bf16.msra.mxu0 %v867
    %963 = vmatmul.bf16.gmra.mxu0 0
    %v964 = vpop.f32.mrf.mxu0
    %v965 = vadd.f32 0.0, %v964
    %v966 = vpop.f32.mrf.mxu0
    %967 = vdwg.mxu0
    %968 = vmatpush.bf16.msra.mxu0 %v896
    %969 = vmatpush.bf16.msra.mxu0 %v892
    %970 = vmatpush.bf16.msra.mxu0 %v888
    %971 = vmatpush.bf16.msra.mxu0 %v884
    %972 = vmatpush.bf16.msra.mxu0 %v880
    %973 = vmatpush.bf16.msra.mxu0 %v876
    %974 = vmatpush.bf16.msra.mxu0 %v872
    %975 = vmatpush.bf16.msra.mxu0 %v868
    %976 = vmatmul.bf16.gmra.mxu0 0
    %v977 = vpop.f32.mrf.mxu0
    %v978 = vadd.f32 0.0, %v977
    %v979 = vpop.f32.mrf.mxu0
    %980 = vdwg.mxu0
    %v985 = vrot.slane %v952, 6
    %v986 = vrot.slane %v965, 4
    %v987 = vrot.slane %v978, 2
    %v988 = vsel %vm197, %v939, %v985
    %v989 = vsel %vm731, %v986, %v987
    %v990 = vsel %vm733, %v988, %v989
    %v992 = vadd.f32 %v736, %v990
    %v993 = vxor.u32 %v992, 2147483648
    %v994 = vmul.f32 %v993, 1.442695
    %v995 = vpow.pop %v994
    %v996 = vadd.f32 %v995, 1.0
    %v997 = vrcp.pop %v996
    %v998 = vmul.f32 %v996, %v997
    %v999 = vsub.f32 1.0, %v998
    %v1000 = vmul.f32 %v997, %v999
    %v1001 = vadd.f32 %v997, %v1000
    %vm1002 = vweird.f32 %v996
    %vm1003 = vweird.f32 %v997
    %vm1004 = vmor %vm1002, %vm1003
    %v1005 = vsel %vm1004, %v997, %v1001
    %v1006 = vand.u32 2147483647, %v996
    %vm1007 = vcmp.eq.f32.partialorder %v1006, 8.507059e+37
    %v1008 = vand.u32 %v996, 2147483648
    %v1009 = vor.u32 1.1754944e-38, %v1008
    %v1010 = vsel %vm1007, %v1009, %v1005
    %v1011 = vmul.f32 1.0, %v1010
    %v1013 = vrot.slane %v992, 2
    %v1015 = vxor.u32 %v1013, 2147483648
    %v1016 = vmul.f32 %v1015, 1.442695
    %v1017 = vpow.pop %v1016
    %v1018 = vadd.f32 %v1017, 1.0
    %v1019 = vrcp.pop %v1018
    %v1020 = vmul.f32 %v1018, %v1019
    %v1021 = vsub.f32 1.0, %v1020
    %v1022 = vmul.f32 %v1019, %v1021
    %v1023 = vadd.f32 %v1019, %v1022
    %vm1024 = vweird.f32 %v1018
    %vm1025 = vweird.f32 %v1019
    %vm1026 = vmor %vm1024, %vm1025
    %v1027 = vsel %vm1026, %v1019, %v1023
    %v1028 = vand.u32 2147483647, %v1018
    %vm1029 = vcmp.eq.f32.partialorder %v1028, 8.507059e+37
    %v1030 = vand.u32 %v1018, 2147483648
    %v1031 = vor.u32 1.1754944e-38, %v1030
    %v1032 = vsel %vm1029, %v1031, %v1027
    %v1033 = vmul.f32 1.0, %v1032
    %v1034 = vrot.slane %v992, 4
    %v1036 = vtanh.pop %v1034
    %v1037 = vrot.slane %v992, 6
    %v1039 = vxor.u32 %v1037, 2147483648
    %v1040 = vmul.f32 %v1039, 1.442695
    %v1041 = vpow.pop %v1040
    %v1042 = vadd.f32 %v1041, 1.0
    %v1043 = vrcp.pop %v1042
    %v1044 = vmul.f32 %v1042, %v1043
    %v1045 = vsub.f32 1.0, %v1044
    %v1046 = vmul.f32 %v1043, %v1045
    %v1047 = vadd.f32 %v1043, %v1046
    %vm1048 = vweird.f32 %v1042
    %vm1049 = vweird.f32 %v1043
    %vm1050 = vmor %vm1048, %vm1049
    %v1051 = vsel %vm1050, %v1043, %v1047
    %v1052 = vand.u32 2147483647, %v1042
    %vm1053 = vcmp.eq.f32.partialorder %v1052, 8.507059e+37
    %v1054 = vand.u32 %v1042, 2147483648
    %v1055 = vor.u32 1.1754944e-38, %v1054
    %v1056 = vsel %vm1053, %v1055, %v1051
    %v1057 = vmul.f32 1.0, %v1056
    %v1058 = vmul.f32 %v1033, 0.0
    %v1059 = vmul.f32 %v1011, %v1036
    %v1060 = vadd.f32 %v1058, %v1059
    %v1061 = vtanh.pop %v1060
    %v1062 = vmul.f32 %v1057, %v1061
    %v1063 = vld [vmem:[%s273] sm:$0xf]
    %v1064 = vunpack.c.l.bf16 %v1063
    %v1065 = vadd.f32 %v1064, %v734
    %v1066 = vpack.c.bf16 %v1062, %v1062
    %1067 = vmatpush.bf16.msra.mxu0 %v893
    %1068 = vmatpush.bf16.msra.mxu0 %v889
    %1069 = vmatpush.bf16.msra.mxu0 %v885
    %1070 = vmatpush.bf16.msra.mxu0 %v881
    %1071 = vmatpush.bf16.msra.mxu0 %v877
    %1072 = vmatpush.bf16.msra.mxu0 %v873
    %1073 = vmatpush.bf16.msra.mxu0 %v869
    %1074 = vmatpush.bf16.msra.mxu0 %v865
    %1075 = vmatmul.bf16.gmra.mxu0 %v1066
    %v1076 = vpop.f32.mrf.mxu0
    %v1077 = vadd.f32 0.0, %v1076
    %v1078 = vpop.f32.mrf.mxu0
    %1079 = vdwg.mxu0
    %1080 = vmatpush.bf16.msra.mxu0 %v894
    %1081 = vmatpush.bf16.msra.mxu0 %v890
    %1082 = vmatpush.bf16.msra.mxu0 %v886
    %1083 = vmatpush.bf16.msra.mxu0 %v882
    %1084 = vmatpush.bf16.msra.mxu0 %v878
    %1085 = vmatpush.bf16.msra.mxu0 %v874
    %1086 = vmatpush.bf16.msra.mxu0 %v870
    %1087 = vmatpush.bf16.msra.mxu0 %v866
    %1088 = vmatmul.bf16.gmra.mxu0 %v1066
    %v1089 = vpop.f32.mrf.mxu0
    %v1090 = vadd.f32 0.0, %v1089
    %v1091 = vpop.f32.mrf.mxu0
    %1092 = vdwg.mxu0
    %1093 = vmatpush.bf16.msra.mxu0 %v895
    %1094 = vmatpush.bf16.msra.mxu0 %v891
    %1095 = vmatpush.bf16.msra.mxu0 %v887
    %1096 = vmatpush.bf16.msra.mxu0 %v883
    %1097 = vmatpush.bf16.msra.mxu0 %v879
    %1098 = vmatpush.bf16.msra.mxu0 %v875
    %1099 = vmatpush.bf16.msra.mxu0 %v871
    %1100 = vmatpush.bf16.msra.mxu0 %v867
    %1101 = vmatmul.bf16.gmra.mxu0 %v1066
    %v1102 = vpop.f32.mrf.mxu0
    %v1103 = vadd.f32 0.0, %v1102
    %v1104 = vpop.f32.mrf.mxu0
    %1105 = vdwg.mxu0
    %1106 = vmatpush.bf16.msra.mxu0 %v896
    %1107 = vmatpush.bf16.msra.mxu0 %v892
    %1108 = vmatpush.bf16.msra.mxu0 %v888
    %1109 = vmatpush.bf16.msra.mxu0 %v884
    %1110 = vmatpush.bf16.msra.mxu0 %v880
    %1111 = vmatpush.bf16.msra.mxu0 %v876
    %1112 = vmatpush.bf16.msra.mxu0 %v872
    %1113 = vmatpush.bf16.msra.mxu0 %v868
    %1114 = vmatmul.bf16.gmra.mxu0 %v1066
    %v1115 = vpop.f32.mrf.mxu0
    %v1116 = vadd.f32 0.0, %v1115
    %v1117 = vpop.f32.mrf.mxu0
    %1118 = vdwg.mxu0
    %v1123 = vrot.slane %v1090, 6
    %v1124 = vrot.slane %v1103, 4
    %v1125 = vrot.slane %v1116, 2
    %v1126 = vsel %vm197, %v1077, %v1123
    %v1127 = vsel %vm731, %v1124, %v1125
    %v1128 = vsel %vm733, %v1126, %v1127
    %v1130 = vadd.f32 %v1065, %v1128
    %v1131 = vxor.u32 %v1130, 2147483648
    %v1132 = vmul.f32 %v1131, 1.442695
    %v1133 = vpow.pop %v1132
    %v1134 = vadd.f32 %v1133, 1.0
    %v1135 = vrcp.pop %v1134
    %v1136 = vmul.f32 %v1134, %v1135
    %v1137 = vsub.f32 1.0, %v1136
    %v1138 = vmul.f32 %v1135, %v1137
    %v1139 = vadd.f32 %v1135, %v1138
    %vm1140 = vweird.f32 %v1134
    %vm1141 = vweird.f32 %v1135
    %vm1142 = vmor %vm1140, %vm1141
    %v1143 = vsel %vm1142, %v1135, %v1139
    %v1144 = vand.u32 2147483647, %v1134
    %vm1145 = vcmp.eq.f32.partialorder %v1144, 8.507059e+37
    %v1146 = vand.u32 %v1134, 2147483648
    %v1147 = vor.u32 1.1754944e-38, %v1146
    %v1148 = vsel %vm1145, %v1147, %v1143
    %v1149 = vmul.f32 1.0, %v1148
    %v1151 = vrot.slane %v1130, 2
    %v1153 = vxor.u32 %v1151, 2147483648
    %v1154 = vmul.f32 %v1153, 1.442695
    %v1155 = vpow.pop %v1154
    %v1156 = vadd.f32 %v1155, 1.0
    %v1157 = vrcp.pop %v1156
    %v1158 = vmul.f32 %v1156, %v1157
    %v1159 = vsub.f32 1.0, %v1158
    %v1160 = vmul.f32 %v1157, %v1159
    %v1161 = vadd.f32 %v1157, %v1160
    %vm1162 = vweird.f32 %v1156
    %vm1163 = vweird.f32 %v1157
    %vm1164 = vmor %vm1162, %vm1163
    %v1165 = vsel %vm1164, %v1157, %v1161
    %v1166 = vand.u32 2147483647, %v1156
    %vm1167 = vcmp.eq.f32.partialorder %v1166, 8.507059e+37
    %v1168 = vand.u32 %v1156, 2147483648
    %v1169 = vor.u32 1.1754944e-38, %v1168
    %v1170 = vsel %vm1167, %v1169, %v1165
    %v1171 = vmul.f32 1.0, %v1170
    %v1172 = vrot.slane %v1130, 4
    %v1174 = vtanh.pop %v1172
    %v1175 = vrot.slane %v1130, 6
    %v1177 = vxor.u32 %v1175, 2147483648
    %v1178 = vmul.f32 %v1177, 1.442695
    %v1179 = vpow.pop %v1178
    %v1180 = vadd.f32 %v1179, 1.0
    %v1181 = vrcp.pop %v1180
    %v1182 = vmul.f32 %v1180, %v1181
    %v1183 = vsub.f32 1.0, %v1182
    %v1184 = vmul.f32 %v1181, %v1183
    %v1185 = vadd.f32 %v1181, %v1184
    %vm1186 = vweird.f32 %v1180
    %vm1187 = vweird.f32 %v1181
    %vm1188 = vmor %vm1186, %vm1187
    %v1189 = vsel %vm1188, %v1181, %v1185
    %v1190 = vand.u32 2147483647, %v1180
    %vm1191 = vcmp.eq.f32.partialorder %v1190, 8.507059e+37
    %v1192 = vand.u32 %v1180, 2147483648
    %v1193 = vor.u32 1.1754944e-38, %v1192
    %v1194 = vsel %vm1191, %v1193, %v1189
    %v1195 = vmul.f32 1.0, %v1194
    %v1196 = vmul.f32 %v1171, %v1060
    %v1197 = vmul.f32 %v1149, %v1174
    %v1198 = vadd.f32 %v1196, %v1197
    %v1199 = vtanh.pop %v1198
    %v1200 = vmul.f32 %v1195, %v1199
    %v1201 = vld [vmem:[%s347] sm:$0xf]
    %v1202 = vunpack.c.l.bf16 %v1201
    %v1203 = vadd.f32 %v1202, %v734
    %v1204 = vpack.c.bf16 %v1200, %v1200
    %1205 = vmatpush.bf16.msra.mxu0 %v893
    %1206 = vmatpush.bf16.msra.mxu0 %v889
    %1207 = vmatpush.bf16.msra.mxu0 %v885
    %1208 = vmatpush.bf16.msra.mxu0 %v881
    %1209 = vmatpush.bf16.msra.mxu0 %v877
    %1210 = vmatpush.bf16.msra.mxu0 %v873
    %1211 = vmatpush.bf16.msra.mxu0 %v869
    %1212 = vmatpush.bf16.msra.mxu0 %v865
    %1213 = vmatmul.bf16.gmra.mxu0 %v1204
    %v1214 = vpop.f32.mrf.mxu0
    %v1215 = vadd.f32 0.0, %v1214
    %v1216 = vpop.f32.mrf.mxu0
    %1217 = vdwg.mxu0
    %1218 = vmatpush.bf16.msra.mxu0 %v894
    %1219 = vmatpush.bf16.msra.mxu0 %v890
    %1220 = vmatpush.bf16.msra.mxu0 %v886
    %1221 = vmatpush.bf16.msra.mxu0 %v882
    %1222 = vmatpush.bf16.msra.mxu0 %v878
    %1223 = vmatpush.bf16.msra.mxu0 %v874
    %1224 = vmatpush.bf16.msra.mxu0 %v870
    %1225 = vmatpush.bf16.msra.mxu0 %v866
    %1226 = vmatmul.bf16.gmra.mxu0 %v1204
    %v1227 = vpop.f32.mrf.mxu0
    %v1228 = vadd.f32 0.0, %v1227
    %v1229 = vpop.f32.mrf.mxu0
    %1230 = vdwg.mxu0
    %1231 = vmatpush.bf16.msra.mxu0 %v895
    %1232 = vmatpush.bf16.msra.mxu0 %v891
    %1233 = vmatpush.bf16.msra.mxu0 %v887
    %1234 = vmatpush.bf16.msra.mxu0 %v883
    %1235 = vmatpush.bf16.msra.mxu0 %v879
    %1236 = vmatpush.bf16.msra.mxu0 %v875
    %1237 = vmatpush.bf16.msra.mxu0 %v871
    %1238 = vmatpush.bf16.msra.mxu0 %v867
    %1239 = vmatmul.bf16.gmra.mxu0 %v1204
    %v1240 = vpop.f32.mrf.mxu0
    %v1241 = vadd.f32 0.0, %v1240
    %v1242 = vpop.f32.mrf.mxu0
    %1243 = vdwg.mxu0
    %1244 = vmatpush.bf16.msra.mxu0 %v896
    %1245 = vmatpush.bf16.msra.mxu0 %v892
    %1246 = vmatpush.bf16.msra.mxu0 %v888
    %1247 = vmatpush.bf16.msra.mxu0 %v884
    %1248 = vmatpush.bf16.msra.mxu0 %v880
    %1249 = vmatpush.bf16.msra.mxu0 %v876
    %1250 = vmatpush.bf16.msra.mxu0 %v872
    %1251 = vmatpush.bf16.msra.mxu0 %v868
    %1252 = vmatmul.bf16.gmra.mxu0 %v1204
    %v1253 = vpop.f32.mrf.mxu0
    %v1254 = vadd.f32 0.0, %v1253
    %v1255 = vpop.f32.mrf.mxu0
    %1256 = vdwg.mxu0
    %v1261 = vrot.slane %v1228, 6
    %v1262 = vrot.slane %v1241, 4
    %v1263 = vrot.slane %v1254, 2
    %v1264 = vsel %vm197, %v1215, %v1261
    %v1265 = vsel %vm731, %v1262, %v1263
    %v1266 = vsel %vm733, %v1264, %v1265
    %v1268 = vadd.f32 %v1203, %v1266
    %v1269 = vxor.u32 %v1268, 2147483648
    %v1270 = vmul.f32 %v1269, 1.442695
    %v1271 = vpow.pop %v1270
    %v1272 = vadd.f32 %v1271, 1.0
    %v1273 = vrcp.pop %v1272
    %v1274 = vmul.f32 %v1272, %v1273
    %v1275 = vsub.f32 1.0, %v1274
    %v1276 = vmul.f32 %v1273, %v1275
    %v1277 = vadd.f32 %v1273, %v1276
    %vm1278 = vweird.f32 %v1272
    %vm1279 = vweird.f32 %v1273
    %vm1280 = vmor %vm1278, %vm1279
    %v1281 = vsel %vm1280, %v1273, %v1277
    %v1282 = vand.u32 2147483647, %v1272
    %vm1283 = vcmp.eq.f32.partialorder %v1282, 8.507059e+37
    %v1284 = vand.u32 %v1272, 2147483648
    %v1285 = vor.u32 1.1754944e-38, %v1284
    %v1286 = vsel %vm1283, %v1285, %v1281
    %v1287 = vmul.f32 1.0, %v1286
    %v1289 = vrot.slane %v1268, 2
    %v1291 = vxor.u32 %v1289, 2147483648
    %v1292 = vmul.f32 %v1291, 1.442695
    %v1293 = vpow.pop %v1292
    %v1294 = vadd.f32 %v1293, 1.0
    %v1295 = vrcp.pop %v1294
    %v1296 = vmul.f32 %v1294, %v1295
    %v1297 = vsub.f32 1.0, %v1296
    %v1298 = vmul.f32 %v1295, %v1297
    %v1299 = vadd.f32 %v1295, %v1298
    %vm1300 = vweird.f32 %v1294
    %vm1301 = vweird.f32 %v1295
    %vm1302 = vmor %vm1300, %vm1301
    %v1303 = vsel %vm1302, %v1295, %v1299
    %v1304 = vand.u32 2147483647, %v1294
    %vm1305 = vcmp.eq.f32.partialorder %v1304, 8.507059e+37
    %v1306 = vand.u32 %v1294, 2147483648
    %v1307 = vor.u32 1.1754944e-38, %v1306
    %v1308 = vsel %vm1305, %v1307, %v1303
    %v1309 = vmul.f32 1.0, %v1308
    %v1310 = vrot.slane %v1268, 4
    %v1312 = vtanh.pop %v1310
    %v1313 = vrot.slane %v1268, 6
    %v1315 = vxor.u32 %v1313, 2147483648
    %v1316 = vmul.f32 %v1315, 1.442695
    %v1317 = vpow.pop %v1316
    %v1318 = vadd.f32 %v1317, 1.0
    %v1319 = vrcp.pop %v1318
    %v1320 = vmul.f32 %v1318, %v1319
    %v1321 = vsub.f32 1.0, %v1320
    %v1322 = vmul.f32 %v1319, %v1321
    %v1323 = vadd.f32 %v1319, %v1322
    %vm1324 = vweird.f32 %v1318
    %vm1325 = vweird.f32 %v1319
    %vm1326 = vmor %vm1324, %vm1325
    %v1327 = vsel %vm1326, %v1319, %v1323
    %v1328 = vand.u32 2147483647, %v1318
    %vm1329 = vcmp.eq.f32.partialorder %v1328, 8.507059e+37
    %v1330 = vand.u32 %v1318, 2147483648
    %v1331 = vor.u32 1.1754944e-38, %v1330
    %v1332 = vsel %vm1329, %v1331, %v1327
    %v1333 = vmul.f32 1.0, %v1332
    %v1334 = vmul.f32 %v1309, %v1198
    %v1335 = vmul.f32 %v1287, %v1312
    %v1336 = vadd.f32 %v1334, %v1335
    %v1337 = vtanh.pop %v1336
    %v1338 = vmul.f32 %v1333, %v1337
    %v1339 = vld [vmem:[%s421] sm:$0xf]
    %v1340 = vunpack.c.l.bf16 %v1339
    %v1341 = vadd.f32 %v1340, %v734
    %v1342 = vpack.c.bf16 %v1338, %v1338
    %1343 = vmatpush.bf16.msra.mxu0 %v893
    %1344 = vmatpush.bf16.msra.mxu0 %v889
    %1345 = vmatpush.bf16.msra.mxu0 %v885
    %1346 = vmatpush.bf16.msra.mxu0 %v881
    %1347 = vmatpush.bf16.msra.mxu0 %v877
    %1348 = vmatpush.bf16.msra.mxu0 %v873
    %1349 = vmatpush.bf16.msra.mxu0 %v869
    %1350 = vmatpush.bf16.msra.mxu0 %v865
    %1351 = vmatmul.bf16.gmra.mxu0 %v1342
    %v1352 = vpop.f32.mrf.mxu0
    %v1353 = vadd.f32 0.0, %v1352
    %v1354 = vpop.f32.mrf.mxu0
    %1355 = vdwg.mxu0
    %1356 = vmatpush.bf16.msra.mxu0 %v894
    %1357 = vmatpush.bf16.msra.mxu0 %v890
    %1358 = vmatpush.bf16.msra.mxu0 %v886
    %1359 = vmatpush.bf16.msra.mxu0 %v882
    %1360 = vmatpush.bf16.msra.mxu0 %v878
    %1361 = vmatpush.bf16.msra.mxu0 %v874
    %1362 = vmatpush.bf16.msra.mxu0 %v870
    %1363 = vmatpush.bf16.msra.mxu0 %v866
    %1364 = vmatmul.bf16.gmra.mxu0 %v1342
    %v1365 = vpop.f32.mrf.mxu0
    %v1366 = vadd.f32 0.0, %v1365
    %v1367 = vpop.f32.mrf.mxu0
    %1368 = vdwg.mxu0
    %1369 = vmatpush.bf16.msra.mxu0 %v895
    %1370 = vmatpush.bf16.msra.mxu0 %v891
    %1371 = vmatpush.bf16.msra.mxu0 %v887
    %1372 = vmatpush.bf16.msra.mxu0 %v883
    %1373 = vmatpush.bf16.msra.mxu0 %v879
    %1374 = vmatpush.bf16.msra.mxu0 %v875
    %1375 = vmatpush.bf16.msra.mxu0 %v871
    %1376 = vmatpush.bf16.msra.mxu0 %v867
    %1377 = vmatmul.bf16.gmra.mxu0 %v1342
    %v1378 = vpop.f32.mrf.mxu0
    %v1379 = vadd.f32 0.0, %v1378
    %v1380 = vpop.f32.mrf.mxu0
    %1381 = vdwg.mxu0
    %1382 = vmatpush.bf16.msra.mxu0 %v896
    %1383 = vmatpush.bf16.msra.mxu0 %v892
    %1384 = vmatpush.bf16.msra.mxu0 %v888
    %1385 = vmatpush.bf16.msra.mxu0 %v884
    %1386 = vmatpush.bf16.msra.mxu0 %v880
    %1387 = vmatpush.bf16.msra.mxu0 %v876
    %1388 = vmatpush.bf16.msra.mxu0 %v872
    %1389 = vmatpush.bf16.msra.mxu0 %v868
    %1390 = vmatmul.bf16.gmra.mxu0 %v1342
    %v1391 = vpop.f32.mrf.mxu0
    %v1392 = vadd.f32 0.0, %v1391
    %v1393 = vpop.f32.mrf.mxu0
    %1394 = vdwg.mxu0
    %v1399 = vrot.slane %v1366, 6
    %v1400 = vrot.slane %v1379, 4
    %v1401 = vrot.slane %v1392, 2
    %v1402 = vsel %vm197, %v1353, %v1399
    %v1403 = vsel %vm731, %v1400, %v1401
    %v1404 = vsel %vm733, %v1402, %v1403
    %v1406 = vadd.f32 %v1341, %v1404
    %v1407 = vxor.u32 %v1406, 2147483648
    %v1408 = vmul.f32 %v1407, 1.442695
    %v1409 = vpow.pop %v1408
    %v1410 = vadd.f32 %v1409, 1.0
    %v1411 = vrcp.pop %v1410
    %v1412 = vmul.f32 %v1410, %v1411
    %v1413 = vsub.f32 1.0, %v1412
    %v1414 = vmul.f32 %v1411, %v1413
    %v1415 = vadd.f32 %v1411, %v1414
    %vm1416 = vweird.f32 %v1410
    %vm1417 = vweird.f32 %v1411
    %vm1418 = vmor %vm1416, %vm1417
    %v1419 = vsel %vm1418, %v1411, %v1415
    %v1420 = vand.u32 2147483647, %v1410
    %vm1421 = vcmp.eq.f32.partialorder %v1420, 8.507059e+37
    %v1422 = vand.u32 %v1410, 2147483648
    %v1423 = vor.u32 1.1754944e-38, %v1422
    %v1424 = vsel %vm1421, %v1423, %v1419
    %v1425 = vmul.f32 1.0, %v1424
    %v1427 = vrot.slane %v1406, 2
    %v1429 = vxor.u32 %v1427, 2147483648
    %v1430 = vmul.f32 %v1429, 1.442695
    %v1431 = vpow.pop %v1430
    %v1432 = vadd.f32 %v1431, 1.0
    %v1433 = vrcp.pop %v1432
    %v1434 = vmul.f32 %v1432, %v1433
    %v1435 = vsub.f32 1.0, %v1434
    %v1436 = vmul.f32 %v1433, %v1435
    %v1437 = vadd.f32 %v1433, %v1436
    %vm1438 = vweird.f32 %v1432
    %vm1439 = vweird.f32 %v1433
    %vm1440 = vmor %vm1438, %vm1439
    %v1441 = vsel %vm1440, %v1433, %v1437
    %v1442 = vand.u32 2147483647, %v1432
    %vm1443 = vcmp.eq.f32.partialorder %v1442, 8.507059e+37
    %v1444 = vand.u32 %v1432, 2147483648
    %v1445 = vor.u32 1.1754944e-38, %v1444
    %v1446 = vsel %vm1443, %v1445, %v1441
    %v1447 = vmul.f32 1.0, %v1446
    %v1448 = vrot.slane %v1406, 4
    %v1450 = vtanh.pop %v1448
    %v1451 = vrot.slane %v1406, 6
    %v1453 = vxor.u32 %v1451, 2147483648
    %v1454 = vmul.f32 %v1453, 1.442695
    %v1455 = vpow.pop %v1454
    %v1456 = vadd.f32 %v1455, 1.0
    %v1457 = vrcp.pop %v1456
    %v1458 = vmul.f32 %v1456, %v1457
    %v1459 = vsub.f32 1.0, %v1458
    %v1460 = vmul.f32 %v1457, %v1459
    %v1461 = vadd.f32 %v1457, %v1460
    %vm1462 = vweird.f32 %v1456
    %vm1463 = vweird.f32 %v1457
    %vm1464 = vmor %vm1462, %vm1463
    %v1465 = vsel %vm1464, %v1457, %v1461
    %v1466 = vand.u32 2147483647, %v1456
    %vm1467 = vcmp.eq.f32.partialorder %v1466, 8.507059e+37
    %v1468 = vand.u32 %v1456, 2147483648
    %v1469 = vor.u32 1.1754944e-38, %v1468
    %v1470 = vsel %vm1467, %v1469, %v1465
    %v1471 = vmul.f32 1.0, %v1470
    %v1472 = vmul.f32 %v1447, %v1336
    %v1473 = vmul.f32 %v1425, %v1450
    %v1474 = vadd.f32 %v1472, %v1473
    %v1475 = vtanh.pop %v1474
    %v1476 = vmul.f32 %v1471, %v1475
    %v1477 = vld [vmem:[%s495] sm:$0xf]
    %v1478 = vunpack.c.l.bf16 %v1477
    %v1479 = vadd.f32 %v1478, %v734
    %v1480 = vpack.c.bf16 %v1476, %v1476
    %1481 = vmatpush.bf16.msra.mxu0 %v893
    %1482 = vmatpush.bf16.msra.mxu0 %v889
    %1483 = vmatpush.bf16.msra.mxu0 %v885
    %1484 = vmatpush.bf16.msra.mxu0 %v881
    %1485 = vmatpush.bf16.msra.mxu0 %v877
    %1486 = vmatpush.bf16.msra.mxu0 %v873
    %1487 = vmatpush.bf16.msra.mxu0 %v869
    %1488 = vmatpush.bf16.msra.mxu0 %v865
    %1489 = vmatmul.bf16.gmra.mxu0 %v1480
    %v1490 = vpop.f32.mrf.mxu0
    %v1491 = vadd.f32 0.0, %v1490
    %v1492 = vpop.f32.mrf.mxu0
    %1493 = vdwg.mxu0
    %1494 = vmatpush.bf16.msra.mxu0 %v894
    %1495 = vmatpush.bf16.msra.mxu0 %v890
    %1496 = vmatpush.bf16.msra.mxu0 %v886
    %1497 = vmatpush.bf16.msra.mxu0 %v882
    %1498 = vmatpush.bf16.msra.mxu0 %v878
    %1499 = vmatpush.bf16.msra.mxu0 %v874
    %1500 = vmatpush.bf16.msra.mxu0 %v870
    %1501 = vmatpush.bf16.msra.mxu0 %v866
    %1502 = vmatmul.bf16.gmra.mxu0 %v1480
    %v1503 = vpop.f32.mrf.mxu0
    %v1504 = vadd.f32 0.0, %v1503
    %v1505 = vpop.f32.mrf.mxu0
    %1506 = vdwg.mxu0
    %1507 = vmatpush.bf16.msra.mxu0 %v895
    %1508 = vmatpush.bf16.msra.mxu0 %v891
    %1509 = vmatpush.bf16.msra.mxu0 %v887
    %1510 = vmatpush.bf16.msra.mxu0 %v883
    %1511 = vmatpush.bf16.msra.mxu0 %v879
    %1512 = vmatpush.bf16.msra.mxu0 %v875
    %1513 = vmatpush.bf16.msra.mxu0 %v871
    %1514 = vmatpush.bf16.msra.mxu0 %v867
    %1515 = vmatmul.bf16.gmra.mxu0 %v1480
    %v1516 = vpop.f32.mrf.mxu0
    %v1517 = vadd.f32 0.0, %v1516
    %v1518 = vpop.f32.mrf.mxu0
    %1519 = vdwg.mxu0
    %1520 = vmatpush.bf16.msra.mxu0 %v896
    %1521 = vmatpush.bf16.msra.mxu0 %v892
    %1522 = vmatpush.bf16.msra.mxu0 %v888
    %1523 = vmatpush.bf16.msra.mxu0 %v884
    %1524 = vmatpush.bf16.msra.mxu0 %v880
    %1525 = vmatpush.bf16.msra.mxu0 %v876
    %1526 = vmatpush.bf16.msra.mxu0 %v872
    %1527 = vmatpush.bf16.msra.mxu0 %v868
    %1528 = vmatmul.bf16.gmra.mxu0 %v1480
    %v1529 = vpop.f32.mrf.mxu0
    %v1530 = vadd.f32 0.0, %v1529
    %v1531 = vpop.f32.mrf.mxu0
    %1532 = vdwg.mxu0
    %v1537 = vrot.slane %v1504, 6
    %v1538 = vrot.slane %v1517, 4
    %v1539 = vrot.slane %v1530, 2
    %v1540 = vsel %vm197, %v1491, %v1537
    %v1541 = vsel %vm731, %v1538, %v1539
    %v1542 = vsel %vm733, %v1540, %v1541
    %v1544 = vadd.f32 %v1479, %v1542
    %v1545 = vxor.u32 %v1544, 2147483648
    %v1546 = vmul.f32 %v1545, 1.442695
    %v1547 = vpow.pop %v1546
    %v1548 = vadd.f32 %v1547, 1.0
    %v1549 = vrcp.pop %v1548
    %v1550 = vmul.f32 %v1548, %v1549
    %v1551 = vsub.f32 1.0, %v1550
    %v1552 = vmul.f32 %v1549, %v1551
    %v1553 = vadd.f32 %v1549, %v1552
    %vm1554 = vweird.f32 %v1548
    %vm1555 = vweird.f32 %v1549
    %vm1556 = vmor %vm1554, %vm1555
    %v1557 = vsel %vm1556, %v1549, %v1553
    %v1558 = vand.u32 2147483647, %v1548
    %vm1559 = vcmp.eq.f32.partialorder %v1558, 8.507059e+37
    %v1560 = vand.u32 %v1548, 2147483648
    %v1561 = vor.u32 1.1754944e-38, %v1560
    %v1562 = vsel %vm1559, %v1561, %v1557
    %v1563 = vmul.f32 1.0, %v1562
    %v1565 = vrot.slane %v1544, 2
    %v1567 = vxor.u32 %v1565, 2147483648
    %v1568 = vmul.f32 %v1567, 1.442695
    %v1569 = vpow.pop %v1568
    %v1570 = vadd.f32 %v1569, 1.0
    %v1571 = vrcp.pop %v1570
    %v1572 = vmul.f32 %v1570, %v1571
    %v1573 = vsub.f32 1.0, %v1572
    %v1574 = vmul.f32 %v1571, %v1573
    %v1575 = vadd.f32 %v1571, %v1574
    %vm1576 = vweird.f32 %v1570
    %vm1577 = vweird.f32 %v1571
    %vm1578 = vmor %vm1576, %vm1577
    %v1579 = vsel %vm1578, %v1571, %v1575
    %v1580 = vand.u32 2147483647, %v1570
    %vm1581 = vcmp.eq.f32.partialorder %v1580, 8.507059e+37
    %v1582 = vand.u32 %v1570, 2147483648
    %v1583 = vor.u32 1.1754944e-38, %v1582
    %v1584 = vsel %vm1581, %v1583, %v1579
    %v1585 = vmul.f32 1.0, %v1584
    %v1586 = vrot.slane %v1544, 4
    %v1588 = vtanh.pop %v1586
    %v1589 = vrot.slane %v1544, 6
    %v1591 = vxor.u32 %v1589, 2147483648
    %v1592 = vmul.f32 %v1591, 1.442695
    %v1593 = vpow.pop %v1592
    %v1594 = vadd.f32 %v1593, 1.0
    %v1595 = vrcp.pop %v1594
    %v1596 = vmul.f32 %v1594, %v1595
    %v1597 = vsub.f32 1.0, %v1596
    %v1598 = vmul.f32 %v1595, %v1597
    %v1599 = vadd.f32 %v1595, %v1598
    %vm1600 = vweird.f32 %v1594
    %vm1601 = vweird.f32 %v1595
    %vm1602 = vmor %vm1600, %vm1601
    %v1603 = vsel %vm1602, %v1595, %v1599
    %v1604 = vand.u32 2147483647, %v1594
    %vm1605 = vcmp.eq.f32.partialorder %v1604, 8.507059e+37
    %v1606 = vand.u32 %v1594, 2147483648
    %v1607 = vor.u32 1.1754944e-38, %v1606
    %v1608 = vsel %vm1605, %v1607, %v1603
    %v1609 = vmul.f32 1.0, %v1608
    %v1610 = vmul.f32 %v1585, %v1474
    %v1611 = vmul.f32 %v1563, %v1588
    %v1612 = vadd.f32 %v1610, %v1611
    %v1613 = vtanh.pop %v1612
    %v1614 = vmul.f32 %v1609, %v1613
    %v1615 = vld [vmem:[%s569] sm:$0xf]
    %v1616 = vunpack.c.l.bf16 %v1615
    %v1617 = vadd.f32 %v1616, %v734
    %v1618 = vpack.c.bf16 %v1614, %v1614
    %1619 = vmatpush.bf16.msra.mxu0 %v893
    %1620 = vmatpush.bf16.msra.mxu0 %v889
    %1621 = vmatpush.bf16.msra.mxu0 %v885
    %1622 = vmatpush.bf16.msra.mxu0 %v881
    %1623 = vmatpush.bf16.msra.mxu0 %v877
    %1624 = vmatpush.bf16.msra.mxu0 %v873
    %1625 = vmatpush.bf16.msra.mxu0 %v869
    %1626 = vmatpush.bf16.msra.mxu0 %v865
    %1627 = vmatmul.bf16.gmra.mxu0 %v1618
    %v1628 = vpop.f32.mrf.mxu0
    %v1629 = vadd.f32 0.0, %v1628
    %v1630 = vpop.f32.mrf.mxu0
    %1631 = vdwg.mxu0
    %1632 = vmatpush.bf16.msra.mxu0 %v894
    %1633 = vmatpush.bf16.msra.mxu0 %v890
    %1634 = vmatpush.bf16.msra.mxu0 %v886
    %1635 = vmatpush.bf16.msra.mxu0 %v882
    %1636 = vmatpush.bf16.msra.mxu0 %v878
    %1637 = vmatpush.bf16.msra.mxu0 %v874
    %1638 = vmatpush.bf16.msra.mxu0 %v870
    %1639 = vmatpush.bf16.msra.mxu0 %v866
    %1640 = vmatmul.bf16.gmra.mxu0 %v1618
    %v1641 = vpop.f32.mrf.mxu0
    %v1642 = vadd.f32 0.0, %v1641
    %v1643 = vpop.f32.mrf.mxu0
    %1644 = vdwg.mxu0
    %1645 = vmatpush.bf16.msra.mxu0 %v895
    %1646 = vmatpush.bf16.msra.mxu0 %v891
    %1647 = vmatpush.bf16.msra.mxu0 %v887
    %1648 = vmatpush.bf16.msra.mxu0 %v883
    %1649 = vmatpush.bf16.msra.mxu0 %v879
    %1650 = vmatpush.bf16.msra.mxu0 %v875
    %1651 = vmatpush.bf16.msra.mxu0 %v871
    %1652 = vmatpush.bf16.msra.mxu0 %v867
    %1653 = vmatmul.bf16.gmra.mxu0 %v1618
    %v1654 = vpop.f32.mrf.mxu0
    %v1655 = vadd.f32 0.0, %v1654
    %v1656 = vpop.f32.mrf.mxu0
    %1657 = vdwg.mxu0
    %1658 = vmatpush.bf16.msra.mxu0 %v896
    %1659 = vmatpush.bf16.msra.mxu0 %v892
    %1660 = vmatpush.bf16.msra.mxu0 %v888
    %1661 = vmatpush.bf16.msra.mxu0 %v884
    %1662 = vmatpush.bf16.msra.mxu0 %v880
    %1663 = vmatpush.bf16.msra.mxu0 %v876
    %1664 = vmatpush.bf16.msra.mxu0 %v872
    %1665 = vmatpush.bf16.msra.mxu0 %v868
    %1666 = vmatmul.bf16.gmra.mxu0 %v1618
    %v1667 = vpop.f32.mrf.mxu0
    %v1668 = vadd.f32 0.0, %v1667
    %v1669 = vpop.f32.mrf.mxu0
    %1670 = vdwg.mxu0
    %v1675 = vrot.slane %v1642, 6
    %v1676 = vrot.slane %v1655, 4
    %v1677 = vrot.slane %v1668, 2
    %v1678 = vsel %vm197, %v1629, %v1675
    %v1679 = vsel %vm731, %v1676, %v1677
    %v1680 = vsel %vm733, %v1678, %v1679
    %v1682 = vadd.f32 %v1617, %v1680
    %v1683 = vxor.u32 %v1682, 2147483648
    %v1684 = vmul.f32 %v1683, 1.442695
    %v1685 = vpow.pop %v1684
    %v1686 = vadd.f32 %v1685, 1.0
    %v1687 = vrcp.pop %v1686
    %v1688 = vmul.f32 %v1686, %v1687
    %v1689 = vsub.f32 1.0, %v1688
    %v1690 = vmul.f32 %v1687, %v1689
    %v1691 = vadd.f32 %v1687, %v1690
    %vm1692 = vweird.f32 %v1686
    %vm1693 = vweird.f32 %v1687
    %vm1694 = vmor %vm1692, %vm1693
    %v1695 = vsel %vm1694, %v1687, %v1691
    %v1696 = vand.u32 2147483647, %v1686
    %vm1697 = vcmp.eq.f32.partialorder %v1696, 8.507059e+37
    %v1698 = vand.u32 %v1686, 2147483648
    %v1699 = vor.u32 1.1754944e-38, %v1698
    %v1700 = vsel %vm1697, %v1699, %v1695
    %v1701 = vmul.f32 1.0, %v1700
    %v1703 = vrot.slane %v1682, 2
    %v1705 = vxor.u32 %v1703, 2147483648
    %v1706 = vmul.f32 %v1705, 1.442695
    %v1707 = vpow.pop %v1706
    %v1708 = vadd.f32 %v1707, 1.0
    %v1709 = vrcp.pop %v1708
    %v1710 = vmul.f32 %v1708, %v1709
    %v1711 = vsub.f32 1.0, %v1710
    %v1712 = vmul.f32 %v1709, %v1711
    %v1713 = vadd.f32 %v1709, %v1712
    %vm1714 = vweird.f32 %v1708
    %vm1715 = vweird.f32 %v1709
    %vm1716 = vmor %vm1714, %vm1715
    %v1717 = vsel %vm1716, %v1709, %v1713
    %v1718 = vand.u32 2147483647, %v1708
    %vm1719 = vcmp.eq.f32.partialorder %v1718, 8.507059e+37
    %v1720 = vand.u32 %v1708, 2147483648
    %v1721 = vor.u32 1.1754944e-38, %v1720
    %v1722 = vsel %vm1719, %v1721, %v1717
    %v1723 = vmul.f32 1.0, %v1722
    %v1724 = vrot.slane %v1682, 4
    %v1726 = vtanh.pop %v1724
    %v1727 = vrot.slane %v1682, 6
    %v1729 = vxor.u32 %v1727, 2147483648
    %v1730 = vmul.f32 %v1729, 1.442695
    %v1731 = vpow.pop %v1730
    %v1732 = vadd.f32 %v1731, 1.0
    %v1733 = vrcp.pop %v1732
    %v1734 = vmul.f32 %v1732, %v1733
    %v1735 = vsub.f32 1.0, %v1734
    %v1736 = vmul.f32 %v1733, %v1735
    %v1737 = vadd.f32 %v1733, %v1736
    %vm1738 = vweird.f32 %v1732
    %vm1739 = vweird.f32 %v1733
    %vm1740 = vmor %vm1738, %vm1739
    %v1741 = vsel %vm1740, %v1733, %v1737
    %v1742 = vand.u32 2147483647, %v1732
    %vm1743 = vcmp.eq.f32.partialorder %v1742, 8.507059e+37
    %v1744 = vand.u32 %v1732, 2147483648
    %v1745 = vor.u32 1.1754944e-38, %v1744
    %v1746 = vsel %vm1743, %v1745, %v1741
    %v1747 = vmul.f32 1.0, %v1746
    %v1748 = vmul.f32 %v1723, %v1612
    %v1749 = vmul.f32 %v1701, %v1726
    %v1750 = vadd.f32 %v1748, %v1749
    %v1751 = vtanh.pop %v1750
    %v1752 = vmul.f32 %v1747, %v1751
    %v1753 = vld [vmem:[%s643] sm:$0xf]
    %v1754 = vunpack.c.l.bf16 %v1753
    %v1755 = vadd.f32 %v1754, %v734
    %v1756 = vpack.c.bf16 %v1752, %v1752
    %1757 = vmatpush.bf16.msra.mxu0 %v893
    %1758 = vmatpush.bf16.msra.mxu0 %v889
    %1759 = vmatpush.bf16.msra.mxu0 %v885
    %1760 = vmatpush.bf16.msra.mxu0 %v881
    %1761 = vmatpush.bf16.msra.mxu0 %v877
    %1762 = vmatpush.bf16.msra.mxu0 %v873
    %1763 = vmatpush.bf16.msra.mxu0 %v869
    %1764 = vmatpush.bf16.msra.mxu0 %v865
    %1765 = vmatmul.bf16.gmra.mxu0 %v1756
    %v1766 = vpop.f32.mrf.mxu0
    %v1767 = vadd.f32 0.0, %v1766
    %v1768 = vpop.f32.mrf.mxu0
    %1769 = vdwg.mxu0
    %1770 = vmatpush.bf16.msra.mxu0 %v894
    %1771 = vmatpush.bf16.msra.mxu0 %v890
    %1772 = vmatpush.bf16.msra.mxu0 %v886
    %1773 = vmatpush.bf16.msra.mxu0 %v882
    %1774 = vmatpush.bf16.msra.mxu0 %v878
    %1775 = vmatpush.bf16.msra.mxu0 %v874
    %1776 = vmatpush.bf16.msra.mxu0 %v870
    %1777 = vmatpush.bf16.msra.mxu0 %v866
    %1778 = vmatmul.bf16.gmra.mxu0 %v1756
    %v1779 = vpop.f32.mrf.mxu0
    %v1780 = vadd.f32 0.0, %v1779
    %v1781 = vpop.f32.mrf.mxu0
    %1782 = vdwg.mxu0
    %1783 = vmatpush.bf16.msra.mxu0 %v895
    %1784 = vmatpush.bf16.msra.mxu0 %v891
    %1785 = vmatpush.bf16.msra.mxu0 %v887
    %1786 = vmatpush.bf16.msra.mxu0 %v883
    %1787 = vmatpush.bf16.msra.mxu0 %v879
    %1788 = vmatpush.bf16.msra.mxu0 %v875
    %1789 = vmatpush.bf16.msra.mxu0 %v871
    %1790 = vmatpush.bf16.msra.mxu0 %v867
    %1791 = vmatmul.bf16.gmra.mxu0 %v1756
    %v1792 = vpop.f32.mrf.mxu0
    %v1793 = vadd.f32 0.0, %v1792
    %v1794 = vpop.f32.mrf.mxu0
    %1795 = vdwg.mxu0
    %1796 = vmatpush.bf16.msra.mxu0 %v896
    %1797 = vmatpush.bf16.msra.mxu0 %v892
    %1798 = vmatpush.bf16.msra.mxu0 %v888
    %1799 = vmatpush.bf16.msra.mxu0 %v884
    %1800 = vmatpush.bf16.msra.mxu0 %v880
    %1801 = vmatpush.bf16.msra.mxu0 %v876
    %1802 = vmatpush.bf16.msra.mxu0 %v872
    %1803 = vmatpush.bf16.msra.mxu0 %v868
    %1804 = vmatmul.bf16.gmra.mxu0 %v1756
    %v1805 = vpop.f32.mrf.mxu0
    %v1806 = vadd.f32 0.0, %v1805
    %v1807 = vpop.f32.mrf.mxu0
    %1808 = vdwg.mxu0
    %v1813 = vrot.slane %v1780, 6
    %v1814 = vrot.slane %v1793, 4
    %v1815 = vrot.slane %v1806, 2
    %v1816 = vsel %vm197, %v1767, %v1813
    %v1817 = vsel %vm731, %v1814, %v1815
    %v1818 = vsel %vm733, %v1816, %v1817
    %v1820 = vadd.f32 %v1755, %v1818
    %v1821 = vxor.u32 %v1820, 2147483648
    %v1822 = vmul.f32 %v1821, 1.442695
    %v1823 = vpow.pop %v1822
    %v1824 = vadd.f32 %v1823, 1.0
    %v1825 = vrcp.pop %v1824
    %v1826 = vmul.f32 %v1824, %v1825
    %v1827 = vsub.f32 1.0, %v1826
    %v1828 = vmul.f32 %v1825, %v1827
    %v1829 = vadd.f32 %v1825, %v1828
    %vm1830 = vweird.f32 %v1824
    %vm1831 = vweird.f32 %v1825
    %vm1832 = vmor %vm1830, %vm1831
    %v1833 = vsel %vm1832, %v1825, %v1829
    %v1834 = vand.u32 2147483647, %v1824
    %vm1835 = vcmp.eq.f32.partialorder %v1834, 8.507059e+37
    %v1836 = vand.u32 %v1824, 2147483648
    %v1837 = vor.u32 1.1754944e-38, %v1836
    %v1838 = vsel %vm1835, %v1837, %v1833
    %v1839 = vmul.f32 1.0, %v1838
    %v1841 = vrot.slane %v1820, 2
    %v1843 = vxor.u32 %v1841, 2147483648
    %v1844 = vmul.f32 %v1843, 1.442695
    %v1845 = vpow.pop %v1844
    %v1846 = vadd.f32 %v1845, 1.0
    %v1847 = vrcp.pop %v1846
    %v1848 = vmul.f32 %v1846, %v1847
    %v1849 = vsub.f32 1.0, %v1848
    %v1850 = vmul.f32 %v1847, %v1849
    %v1851 = vadd.f32 %v1847, %v1850
    %vm1852 = vweird.f32 %v1846
    %vm1853 = vweird.f32 %v1847
    %vm1854 = vmor %vm1852, %vm1853
    %v1855 = vsel %vm1854, %v1847, %v1851
    %v1856 = vand.u32 2147483647, %v1846
    %vm1857 = vcmp.eq.f32.partialorder %v1856, 8.507059e+37
    %v1858 = vand.u32 %v1846, 2147483648
    %v1859 = vor.u32 1.1754944e-38, %v1858
    %v1860 = vsel %vm1857, %v1859, %v1855
    %v1861 = vmul.f32 1.0, %v1860
    %v1862 = vrot.slane %v1820, 4
    %v1864 = vtanh.pop %v1862
    %v1865 = vrot.slane %v1820, 6
    %v1867 = vxor.u32 %v1865, 2147483648
    %v1868 = vmul.f32 %v1867, 1.442695
    %v1869 = vpow.pop %v1868
    %v1870 = vadd.f32 %v1869, 1.0
    %v1871 = vrcp.pop %v1870
    %v1872 = vmul.f32 %v1870, %v1871
    %v1873 = vsub.f32 1.0, %v1872
    %v1874 = vmul.f32 %v1871, %v1873
    %v1875 = vadd.f32 %v1871, %v1874
    %vm1876 = vweird.f32 %v1870
    %vm1877 = vweird.f32 %v1871
    %vm1878 = vmor %vm1876, %vm1877
    %v1879 = vsel %vm1878, %v1871, %v1875
    %v1880 = vand.u32 2147483647, %v1870
    %vm1881 = vcmp.eq.f32.partialorder %v1880, 8.507059e+37
    %v1882 = vand.u32 %v1870, 2147483648
    %v1883 = vor.u32 1.1754944e-38, %v1882
    %v1884 = vsel %vm1881, %v1883, %v1879
    %v1885 = vmul.f32 1.0, %v1884
    %v1886 = vmul.f32 %v1861, %v1750
    %v1887 = vmul.f32 %v1839, %v1864
    %v1888 = vadd.f32 %v1886, %v1887
    %v1889 = vtanh.pop %v1888
    %v1890 = vmul.f32 %v1885, %v1889
    %v1891 = vld [vmem:[%s717] sm:$0xf]
    %v1892 = vunpack.c.l.bf16 %v1891
    %v1893 = vadd.f32 %v1892, %v734
    %v1894 = vpack.c.bf16 %v1890, %v1890
    %1895 = vmatpush.bf16.msra.mxu0 %v893
    %1896 = vmatpush.bf16.msra.mxu0 %v889
    %1897 = vmatpush.bf16.msra.mxu0 %v885
    %1898 = vmatpush.bf16.msra.mxu0 %v881
    %1899 = vmatpush.bf16.msra.mxu0 %v877
    %1900 = vmatpush.bf16.msra.mxu0 %v873
    %1901 = vmatpush.bf16.msra.mxu0 %v869
    %1902 = vmatpush.bf16.msra.mxu0 %v865
    %1903 = vmatmul.bf16.gmra.mxu0 %v1894
    %v1904 = vpop.f32.mrf.mxu0
    %v1905 = vadd.f32 0.0, %v1904
    %v1906 = vpop.f32.mrf.mxu0
    %1907 = vdwg.mxu0
    %1908 = vmatpush.bf16.msra.mxu0 %v894
    %1909 = vmatpush.bf16.msra.mxu0 %v890
    %1910 = vmatpush.bf16.msra.mxu0 %v886
    %1911 = vmatpush.bf16.msra.mxu0 %v882
    %1912 = vmatpush.bf16.msra.mxu0 %v878
    %1913 = vmatpush.bf16.msra.mxu0 %v874
    %1914 = vmatpush.bf16.msra.mxu0 %v870
    %1915 = vmatpush.bf16.msra.mxu0 %v866
    %1916 = vmatmul.bf16.gmra.mxu0 %v1894
    %v1917 = vpop.f32.mrf.mxu0
    %v1918 = vadd.f32 0.0, %v1917
    %v1919 = vpop.f32.mrf.mxu0
    %1920 = vdwg.mxu0
    %1921 = vmatpush.bf16.msra.mxu0 %v895
    %1922 = vmatpush.bf16.msra.mxu0 %v891
    %1923 = vmatpush.bf16.msra.mxu0 %v887
    %1924 = vmatpush.bf16.msra.mxu0 %v883
    %1925 = vmatpush.bf16.msra.mxu0 %v879
    %1926 = vmatpush.bf16.msra.mxu0 %v875
    %1927 = vmatpush.bf16.msra.mxu0 %v871
    %1928 = vmatpush.bf16.msra.mxu0 %v867
    %1929 = vmatmul.bf16.gmra.mxu0 %v1894
    %v1930 = vpop.f32.mrf.mxu0
    %v1931 = vadd.f32 0.0, %v1930
    %v1932 = vpop.f32.mrf.mxu0
    %1933 = vdwg.mxu0
    %1934 = vmatpush.bf16.msra.mxu0 %v896
    %1935 = vmatpush.bf16.msra.mxu0 %v892
    %1936 = vmatpush.bf16.msra.mxu0 %v888
    %1937 = vmatpush.bf16.msra.mxu0 %v884
    %1938 = vmatpush.bf16.msra.mxu0 %v880
    %1939 = vmatpush.bf16.msra.mxu0 %v876
    %1940 = vmatpush.bf16.msra.mxu0 %v872
    %1941 = vmatpush.bf16.msra.mxu0 %v868
    %1942 = vmatmul.bf16.gmra.mxu0 %v1894
    %v1943 = vpop.f32.mrf.mxu0
    %v1944 = vadd.f32 0.0, %v1943
    %v1945 = vpop.f32.mrf.mxu0
    %1946 = vdwg.mxu0
    %v1951 = vrot.slane %v1918, 6
    %v1952 = vrot.slane %v1931, 4
    %v1953 = vrot.slane %v1944, 2
    %v1954 = vsel %vm197, %v1905, %v1951
    %v1955 = vsel %vm731, %v1952, %v1953
    %v1956 = vsel %vm733, %v1954, %v1955
    %v1958 = vadd.f32 %v1893, %v1956
    %v1959 = vxor.u32 %v1958, 2147483648
    %v1960 = vmul.f32 %v1959, 1.442695
    %v1961 = vpow.pop %v1960
    %v1962 = vadd.f32 %v1961, 1.0
    %v1963 = vrcp.pop %v1962
    %v1964 = vmul.f32 %v1962, %v1963
    %v1965 = vsub.f32 1.0, %v1964
    %v1966 = vmul.f32 %v1963, %v1965
    %v1967 = vadd.f32 %v1963, %v1966
    %vm1968 = vweird.f32 %v1962
    %vm1969 = vweird.f32 %v1963
    %vm1970 = vmor %vm1968, %vm1969
    %v1971 = vsel %vm1970, %v1963, %v1967
    %v1972 = vand.u32 2147483647, %v1962
    %vm1973 = vcmp.eq.f32.partialorder %v1972, 8.507059e+37
    %v1974 = vand.u32 %v1962, 2147483648
    %v1975 = vor.u32 1.1754944e-38, %v1974
    %v1976 = vsel %vm1973, %v1975, %v1971
    %v1977 = vmul.f32 1.0, %v1976
    %v1979 = vrot.slane %v1958, 2
    %v1981 = vxor.u32 %v1979, 2147483648
    %v1982 = vmul.f32 %v1981, 1.442695
    %v1983 = vpow.pop %v1982
    %v1984 = vadd.f32 %v1983, 1.0
    %v1985 = vrcp.pop %v1984
    %v1986 = vmul.f32 %v1984, %v1985
    %v1987 = vsub.f32 1.0, %v1986
    %v1988 = vmul.f32 %v1985, %v1987
    %v1989 = vadd.f32 %v1985, %v1988
    %vm1990 = vweird.f32 %v1984
    %vm1991 = vweird.f32 %v1985
    %vm1992 = vmor %vm1990, %vm1991
    %v1993 = vsel %vm1992, %v1985, %v1989
    %v1994 = vand.u32 2147483647, %v1984
    %vm1995 = vcmp.eq.f32.partialorder %v1994, 8.507059e+37
    %v1996 = vand.u32 %v1984, 2147483648
    %v1997 = vor.u32 1.1754944e-38, %v1996
    %v1998 = vsel %vm1995, %v1997, %v1993
    %v1999 = vmul.f32 1.0, %v1998
    %v2000 = vrot.slane %v1958, 4
    %v2002 = vtanh.pop %v2000
    %v2003 = vrot.slane %v1958, 6
    %v2005 = vxor.u32 %v2003, 2147483648
    %v2006 = vmul.f32 %v2005, 1.442695
    %v2007 = vpow.pop %v2006
    %v2008 = vadd.f32 %v2007, 1.0
    %v2009 = vrcp.pop %v2008
    %v2010 = vmul.f32 %v2008, %v2009
    %v2011 = vsub.f32 1.0, %v2010
    %v2012 = vmul.f32 %v2009, %v2011
    %v2013 = vadd.f32 %v2009, %v2012
    %vm2014 = vweird.f32 %v2008
    %vm2015 = vweird.f32 %v2009
    %vm2016 = vmor %vm2014, %vm2015
    %v2017 = vsel %vm2016, %v2009, %v2013
    %v2018 = vand.u32 2147483647, %v2008
    %vm2019 = vcmp.eq.f32.partialorder %v2018, 8.507059e+37
    %v2020 = vand.u32 %v2008, 2147483648
    %v2021 = vor.u32 1.1754944e-38, %v2020
    %v2022 = vsel %vm2019, %v2021, %v2017
    %v2023 = vmul.f32 1.0, %v2022
    %v2024 = vmul.f32 %v1999, %v1888
    %v2025 = vmul.f32 %v1977, %v2002
    %v2026 = vadd.f32 %v2024, %v2025
    %v2027 = vtanh.pop %v2026
    %v2028 = vmul.f32 %v2023, %v2027
    %v2029 = vpack.c.bf16 %v2028, %v2028
    %v2030 = vld [vmem:[#allocation11] sm:$0xf]
    %v2031 = vld [vmem:[#allocation11 + $0x4] sm:$0xf]
    %v2032 = vld [vmem:[#allocation11 + $0x8] sm:$0xf]
    %v2033 = vld [vmem:[#allocation11 + $0xc] sm:$0xf]
    %v2034 = vld [vmem:[#allocation11 + $0x10] sm:$0xf]
    %v2035 = vld [vmem:[#allocation11 + $0x14] sm:$0xf]
    %v2036 = vld [vmem:[#allocation11 + $0x18] sm:$0xf]
    %v2037 = vld [vmem:[#allocation11 + $0x1c] sm:$0xf]
    %v2038 = vld [vmem:[#allocation11 + $0x20] sm:$0xf]
    %v2039 = vld [vmem:[#allocation11 + $0x24] sm:$0xf]
    %v2040 = vld [vmem:[#allocation11 + $0x28] sm:$0xf]
    %v2041 = vld [vmem:[#allocation11 + $0x2c] sm:$0xf]
    %v2042 = vld [vmem:[#allocation11 + $0x30] sm:$0xf]
    %v2043 = vld [vmem:[#allocation11 + $0x34] sm:$0xf]
    %v2044 = vld [vmem:[#allocation11 + $0x38] sm:$0xf]
    %v2045 = vld [vmem:[#allocation11 + $0x3c] sm:$0xf]
    %v2046 = vld [vmem:[%s5] sm:$0x1]
    %v2048 = vperm.slane %v2046, 0
    %v2066 = vunpack.c.l.b16 %v2030
    %v2067 = vunpack.c.l.b16 %v2031
    %v2068 = vunpack.c.l.b16 %v2032
    %v2069 = vunpack.c.l.b16 %v2033
    %v2070 = vunpack.c.l.b16 %v2034
    %v2071 = vunpack.c.l.b16 %v2035
    %v2072 = vunpack.c.l.b16 %v2036
    %v2073 = vunpack.c.l.b16 %v2037
    %v2074 = vunpack.c.l.b16 %v2038
    %v2075 = vunpack.c.l.b16 %v2039
    %v2076 = vunpack.c.l.b16 %v2040
    %v2077 = vunpack.c.l.b16 %v2041
    %v2078 = vunpack.c.l.b16 %v2042
    %v2079 = vunpack.c.l.b16 %v2043
    %v2080 = vunpack.c.l.b16 %v2044
    %v2081 = vunpack.c.l.b16 %v2045
    %v2082 = vpack.c.b16 %v2067, %v2066
    %v2083 = vpack.c.b16 %v2069, %v2068
    %v2084 = vpack.c.b16 %v2071, %v2070
    %v2085 = vpack.c.b16 %v2073, %v2072
    %v2086 = vpack.c.b16 %v2075, %v2074
    %v2087 = vpack.c.b16 %v2077, %v2076
    %v2088 = vpack.c.b16 %v2079, %v2078
    %v2089 = vpack.c.b16 %v2081, %v2080
    %2098 = vmatpush.bf16.msra.mxu0 %v2089
    %2099 = vmatpush.bf16.msra.mxu0 %v2088
    %2100 = vmatpush.bf16.msra.mxu0 %v2087
    %2101 = vmatpush.bf16.msra.mxu0 %v2086
    %2102 = vmatpush.bf16.msra.mxu0 %v2085
    %2103 = vmatpush.bf16.msra.mxu0 %v2084
    %2104 = vmatpush.bf16.msra.mxu0 %v2083
    %2105 = vmatpush.bf16.msra.mxu0 %v2082
    %2106 = vmatmul.bf16.gmra.mxu0 %v2029
    %v2107 = vpop.f32.mrf.mxu0
    %v2108 = vadd.f32 %v2048, %v2107
    %v2109 = vpop.f32.mrf.mxu0
    %2110 = vdwg.mxu0
    %2111 = vst [vmem:[#allocation12] sm:$0x3] %v2108
    // Predicated region
    $region46: #{tpu_custom_call.1} parent=1 // pred_check
      _
    $region47: #{tpu_custom_call.1} parent=1 // pred_check_branch
      %2113 = sbr.rel (0) target = $region49
    $region48: #{tpu_custom_call.1} parent=1 // pred_region
      %2115 = vsyncadd [#allocation5], 0
      %s2117 = sshll.u32 [#allocation12], 4
      %s2118 = int_to_ptr.vmem [resolvable:$true] %s2117
      %s2119 = sshll.u32 %s6, 4
      %s2120 = int_to_ptr.hbm [resolvable:$true] %s2119
      %2122 = dma.vmem_to_hbm [thread:$0]  %s2118, 32, %s2120, [#allocation5]
    $region49: #{tpu_custom_call.1} parent=1 // pred_fallthru
      _
    // Predicated region
    $region50: #{tpu_custom_call.1} parent=1 // pred_check
      _
    $region51: #{tpu_custom_call.1} parent=1 // pred_check_branch
      %2124 = sbr.rel (0) target = $region53
    $region52: #{tpu_custom_call.1} parent=1 // pred_region
      %2126 = dma.done [#allocation5], 32
    $region53: #{tpu_custom_call.1} parent=1 // pred_fallthru
      _
    %2127 = vsyncpa [#allocation4], 1
    %2128 = vsyncpa [#allocation7], 1
    %2129 = vsyncpa [#allocation10], 1
    %2130 = vsyncpa [#allocation5], 1

</llo_original>
